<compile_context>
chip_gen: v5e
topology: v5e:2x2
jax: 0.10.0
libtpu: 0.0.40
codegen_flags: <defaults>
</compile_context>

<pallas_src>
import functools
import math

import jax
import jax.numpy as jnp
from jax import lax
from jax.experimental import pallas as pl
from jax.experimental.pallas import tpu as pltpu


def _round_up(x, m):
    return ((x + m - 1) // m) * m


def _pad2d(a, m_pad, n_pad):
    M, N = a.shape
    if M == m_pad and N == n_pad:
        return a
    return jnp.pad(a, ((0, m_pad - M), (0, n_pad - N)))


# -----------------------------------------------------------------------------
# Fused two-stage MXU kernel (one grid step = one tm x full-K row strip):
#   stage 1:  y = SiLU(x @ W1 + b1)        (BN scale pre-folded into W1)
#   stage 2:  o = act2?(y @ W2 + b2)       (BN scale pre-folded into W2)
# W1/b1/W2/b2 have constant index_maps -> fetched once, resident in VMEM.
# -----------------------------------------------------------------------------
def _fused_two_matmul_kernel(x_ref, w1_ref, b1_ref, w2_ref, b2_ref, o_ref, *,
                             act2):
    y = jnp.dot(x_ref[...], w1_ref[...], preferred_element_type=jnp.float32)
    y = y + b1_ref[...]
    y = y * jax.nn.sigmoid(y)                       # SiLU, f32 (EUP)
    z = jnp.dot(y.astype(jnp.bfloat16), w2_ref[...],
                preferred_element_type=jnp.float32)
    z = z + b2_ref[...]
    if act2:
        z = z * jax.nn.sigmoid(z)
    o_ref[...] = z.astype(o_ref.dtype)


def fused_two_stage_matmul(x, w1, b1, w2, b2, *, act2, tm=512,
                           out_dtype=jnp.bfloat16):
    """act2?(SiLU(x @ w1 + b1) @ w2 + b2)  -- bf16 operands, f32 accumulate."""
    M, K = x.shape
    K1, Nmid = w1.shape
    Nmid2, Nout = w2.shape
    assert K == K1 and Nmid == Nmid2

    tm_eff = min(tm, _round_up(M, 8))
    M_pad = _round_up(M, tm_eff)
    K_pad = _round_up(K, 128)
    Nmid_pad = _round_up(Nmid, 128)
    Nout_pad = _round_up(Nout, 128)

    xp = _pad2d(x.astype(jnp.bfloat16), M_pad, K_pad)
    w1p = _pad2d(w1.astype(jnp.bfloat16), K_pad, Nmid_pad)
    b1p = _pad2d(b1.reshape(1, Nmid).astype(jnp.float32), 1, Nmid_pad)
    w2p = _pad2d(w2.astype(jnp.bfloat16), Nmid_pad, Nout_pad)
    b2p = _pad2d(b2.reshape(1, Nout).astype(jnp.float32), 1, Nout_pad)

    grid = (M_pad // tm_eff,)

    out = pl.pallas_call(
        functools.partial(_fused_two_matmul_kernel, act2=act2),
        out_shape=jax.ShapeDtypeStruct((M_pad, Nout_pad), out_dtype),
        grid_spec=pltpu.PrefetchScalarGridSpec(
            num_scalar_prefetch=0,
            grid=grid,
            in_specs=[
                pl.BlockSpec((tm_eff, K_pad), lambda i: (i, 0)),      # activations
                pl.BlockSpec((K_pad, Nmid_pad), lambda i: (0, 0)),    # W1 (resident)
                pl.BlockSpec((1, Nmid_pad), lambda i: (0, 0)),        # b1 (resident)
                pl.BlockSpec((Nmid_pad, Nout_pad), lambda i: (0, 0)), # W2 (resident)
                pl.BlockSpec((1, Nout_pad), lambda i: (0, 0)),        # b2 (resident)
            ],
            out_specs=pl.BlockSpec((tm_eff, Nout_pad), lambda i: (i, 0)),
        ),
        compiler_params=pltpu.CompilerParams(
            dimension_semantics=("parallel",)),   # v7x: shard M across both TCs
    )(xp, w1p, b1p, w2p, b2p)
    return out[:M, :Nout]


# -----------------------------------------------------------------------------
# Layout plumbing (host/XLA side, bf16)
# -----------------------------------------------------------------------------
def bn_fold(gamma, beta, mean, var, eps=1e-5):
    scale = gamma / jnp.sqrt(var + eps)
    bias = beta - mean * scale
    return scale, bias


def _im2col3x3(x_nhwc):
    # TODO(synk): im2col still materializes 9x the activation in HBM (now bf16);
    # a fully fused in-kernel tap-accumulating DMA scheme would avoid this.
    B, H, W, C = x_nhwc.shape
    xp = jnp.pad(x_nhwc.astype(jnp.bfloat16), ((0, 0), (1, 1), (1, 1), (0, 0)))
    cols = [xp[:, di:di + H, dj:dj + W, :] for di in range(3) for dj in range(3)]
    return jnp.concatenate(cols, axis=-1).reshape(B * H * W, 9 * C)


# -----------------------------------------------------------------------------
# Proto module (JAX/Pallas mirror of the PyTorch module)
# -----------------------------------------------------------------------------
class Proto:
    # TODO(synk): BatchNorm is implemented in eval mode (folded running stats);
    # training-mode batch-statistic computation is not implemented.
    def __init__(self, c1, c_=256, c2=32, *, key):
        ks = jax.random.split(key, 8)

        def normal(k, shape, s):
            return s * jax.random.normal(k, shape, jnp.float32)

        def bn(k, c):
            k1, k2, k3, k4 = jax.random.split(k, 4)
            gamma = 1.0 + 0.1 * jax.random.normal(k1, (c,), jnp.float32)
            beta = 0.1 * jax.random.normal(k2, (c,), jnp.float32)
            mean = 0.1 * jax.random.normal(k3, (c,), jnp.float32)
            var = 1.0 + 0.1 * jax.random.uniform(k4, (c,), jnp.float32)
            return gamma, beta, mean, var

        self.w1 = normal(ks[0], (c_, c1, 3, 3), 1.0 / math.sqrt(9 * c1))
        self.bn1 = bn(ks[1], c_)
        self.wt = normal(ks[2], (c_, c_, 2, 2), 1.0 / math.sqrt(c_))
        self.bt = 0.1 * jax.random.normal(ks[3], (c_,), jnp.float32)
        self.w2 = normal(ks[4], (c_, c_, 3, 3), 1.0 / math.sqrt(9 * c_))
        self.bn2 = bn(ks[5], c_)
        self.w3 = normal(ks[6], (c2, c_, 1, 1), 1.0 / math.sqrt(c_))
        self.bn3 = bn(ks[7], c2)

    def __call__(self, x_nchw):
        B, _, H, W = x_nchw.shape
        c_ = self.w1.shape[0]
        c2 = self.w3.shape[0]

        s1, b1 = bn_fold(*self.bn1)
        s2, b2 = bn_fold(*self.bn2)
        s3, b3 = bn_fold(*self.bn3)

        # Host-side weight layout + BN-scale folding (tiny, done once).
        w1_flat = jnp.transpose(self.w1, (2, 3, 1, 0)).reshape(-1, c_) * s1[None, :]
        wt_flat = jnp.transpose(self.wt, (0, 2, 3, 1)).reshape(c_, 4 * c_)
        bt_flat = jnp.tile(self.bt, 4)
        w2_flat = jnp.transpose(self.w2, (2, 3, 1, 0)).reshape(-1, c_) * s2[None, :]
        w3_flat = self.w3.reshape(c2, c_).T * s3[None, :]

        x = jnp.transpose(x_nchw, (0, 2, 3, 1))                    # NHWC internally

        # ---- cv1 (3x3 + BN + SiLU) fused with the 2x2/s2 deconv -------------
        p1 = _im2col3x3(x)                                          # (B*H*W, 9*c1)
        y = fused_two_stage_matmul(p1, w1_flat, b1, wt_flat, bt_flat, act2=False)
        # pixel shuffle (bf16): (B,H,W,2,2,c_) -> (B,2H,2W,c_)
        y = y.reshape(B, H, W, 2, 2, c_).transpose(0, 1, 3, 2, 4, 5)
        y = y.reshape(B, 2 * H, 2 * W, c_)

        # ---- cv2 (3x3 + BN + SiLU) fused with cv3 (1x1 + BN + SiLU) ---------
        p2 = _im2col3x3(y)                                          # (B*4HW, 9*c_)
        z = fused_two_stage_matmul(p2, w2_flat, b2, w3_flat, b3, act2=True)
        z = z.reshape(B, 2 * H, 2 * W, c2)

        return jnp.transpose(z, (0, 3, 1, 2)).astype(jnp.float32)   # NCHW f32


# -----------------------------------------------------------------------------
# Pure-JAX f32 reference (for correctness check only; not part of kernel path)
# -----------------------------------------------------------------------------
def _ref_proto(x, m):
    s1, b1 = bn_fold(*m.bn1)
    s2, b2 = bn_fold(*m.bn2)
    s3, b3 = bn_fold(*m.bn3)

    def conv_bn_silu(x, w, s, b, k):
        pad = k // 2
        y = lax.conv_general_dilated(
            x, w, (1, 1), ((pad, pad), (pad, pad)),
            dimension_numbers=("NCHW", "OIHW", "NCHW"))
        y = y * s[None, :, None, None] + b[None, :, None, None]
        return y * jax.nn.sigmoid(y)

    y = conv_bn_silu(x, m.w1, s1, b1, 3)
    B, C, H, W = y.shape
    O = m.wt.shape[1]
    up = jnp.einsum("bchw,cokl->bohwkl", y, m.wt)
    up = up.transpose(0, 1, 2, 4, 3, 5).reshape(B, O, 2 * H, 2 * W)
    y = up + m.bt[None, :, None, None]
    y = conv_bn_silu(y, m.w2, s2, b2, 3)
    y = conv_bn_silu(y, m.w3, s3, b3, 1)
    return y


if __name__ == "__main__":
    key = jax.random.PRNGKey(0)
    kx, kp = jax.random.split(key)

    B, c1, H, W = 2, 8, 16, 16
    c_, c2 = 32, 16

    x = jax.random.normal(kx, (B, c1, H, W), dtype=jnp.float32)
    module = Proto(c1, c_=c_, c2=c2, key=kp)

    out = jax.block_until_ready(module(x))
    ref = jax.block_until_ready(_ref_proto(x, module))

    assert out.shape == (B, c2, 2 * H, 2 * W), out.shape
    err = float(jnp.max(jnp.abs(out - ref)))
    if err < 5e-2:
        print("KERNEL_OK")
    else:
        print(f"MISMATCH max_abs_err={err}")
</pallas_src>

<mosaic_0001>
module attributes {stable_mosaic.version = 11 : i64} {
  func.func @_fused_two_matmul_kernel(%arg0: i32, %arg1: memref<512x128xbf16, #tpu.memory_space<vmem>>, %arg2: memref<128x128xbf16, #tpu.memory_space<vmem>>, %arg3: memref<1x128xf32, #tpu.memory_space<vmem>>, %arg4: memref<128x128xbf16, #tpu.memory_space<vmem>>, %arg5: memref<1x128xf32, #tpu.memory_space<vmem>>, %arg6: memref<512x128xbf16, #tpu.memory_space<vmem>>) attributes {dimension_semantics = [#tpu.dimension_semantics<parallel>], iteration_bounds = array<i64: 1>, scalar_prefetch = 0 : i64, scratch_operands = 0 : i64, tpu.core_type = #tpu.core_type<tc>, window_params = [{transform_indices = @transform_0, window_bounds = array<i64: 512, 128>}, {pipeline_mode = #tpu.pipeline_mode<synchronous>, transform_indices = @transform_1, window_bounds = array<i64: 128, 128>}, {pipeline_mode = #tpu.pipeline_mode<synchronous>, transform_indices = @transform_2, window_bounds = array<i64: 1, 128>}, {pipeline_mode = #tpu.pipeline_mode<synchronous>, transform_indices = @transform_3, window_bounds = array<i64: 128, 128>}, {pipeline_mode = #tpu.pipeline_mode<synchronous>, transform_indices = @transform_4, window_bounds = array<i64: 1, 128>}, {transform_indices = @transform_5, window_bounds = array<i64: 512, 128>}]} {
    %c0 = arith.constant 0 : index
    %c0_0 = arith.constant 0 : index
    %0 = vector.load %arg1[%c0, %c0_0] : memref<512x128xbf16, #tpu.memory_space<vmem>>, vector<512x128xbf16>
    %c0_1 = arith.constant 0 : index
    %c0_2 = arith.constant 0 : index
    %1 = vector.load %arg2[%c0_1, %c0_2] : memref<128x128xbf16, #tpu.memory_space<vmem>>, vector<128x128xbf16>
    %cst = arith.constant dense<0.000000e+00> : vector<512x128xf32>
    %2 = tpu.matmul %0, %1, %cst {dimension_numbers = #tpu.dot_dimension_numbers<[1], [0], [0], [1], [0, 0, 1, 1], [], []>} : vector<512x128xbf16>, vector<128x128xbf16>, vector<512x128xf32> -> vector<512x128xf32>
    %c0_3 = arith.constant 0 : index
    %c0_4 = arith.constant 0 : index
    %3 = vector.load %arg3[%c0_3, %c0_4] : memref<1x128xf32, #tpu.memory_space<vmem>>, vector<1x128xf32>
    %4 = vector.broadcast %3 : vector<1x128xf32> to vector<512x128xf32>
    %5 = arith.addf %2, %4 : vector<512x128xf32>
    %6 = arith.negf %5 : vector<512x128xf32>
    %7 = math.exp %6 : vector<512x128xf32>
    %cst_5 = arith.constant 1.000000e+00 : f32
    %8 = vector.broadcast %cst_5 : f32 to vector<512x128xf32>
    %9 = arith.addf %8, %7 : vector<512x128xf32>
    %10 = arith.divf %8, %9 : vector<512x128xf32>
    %11 = arith.mulf %5, %10 : vector<512x128xf32>
    %12 = arith.truncf %11 : vector<512x128xf32> to vector<512x128xbf16>
    %c0_6 = arith.constant 0 : index
    %c0_7 = arith.constant 0 : index
    %13 = vector.load %arg4[%c0_6, %c0_7] : memref<128x128xbf16, #tpu.memory_space<vmem>>, vector<128x128xbf16>
    %cst_8 = arith.constant dense<0.000000e+00> : vector<512x128xf32>
    %14 = tpu.matmul %12, %13, %cst_8 {dimension_numbers = #tpu.dot_dimension_numbers<[1], [0], [0], [1], [0, 0, 1, 1], [], []>} : vector<512x128xbf16>, vector<128x128xbf16>, vector<512x128xf32> -> vector<512x128xf32>
    %c0_9 = arith.constant 0 : index
    %c0_10 = arith.constant 0 : index
    %15 = vector.load %arg5[%c0_9, %c0_10] : memref<1x128xf32, #tpu.memory_space<vmem>>, vector<1x128xf32>
    %16 = vector.broadcast %15 : vector<1x128xf32> to vector<512x128xf32>
    %17 = arith.addf %14, %16 : vector<512x128xf32>
    %18 = arith.truncf %17 : vector<512x128xf32> to vector<512x128xbf16>
    %c0_11 = arith.constant 0 : index
    %c0_12 = arith.constant 0 : index
    %19 = vector.load %arg6[%c0_11, %c0_12] : memref<512x128xbf16, #tpu.memory_space<vmem>>, vector<512x128xbf16>
    tpu.vector_store %arg6[%c0_11, %c0_12], %18 {strides = array<i32>} : memref<512x128xbf16, #tpu.memory_space<vmem>>, vector<512x128xbf16>,
    return
  }
  func.func @transform_0(%arg0: i32) -> (i32, i32) {
    %c0_i32 = arith.constant 0 : i32
    %c0_i32_0 = arith.constant 0 : i32
    return %arg0, %c0_i32 : i32, i32
  }
  func.func @transform_1(%arg0: i32) -> (i32, i32) {
    %c0_i32 = arith.constant 0 : i32
    %c0_i32_0 = arith.constant 0 : i32
    %c0_i32_1 = arith.constant 0 : i32
    return %c0_i32, %c0_i32_0 : i32, i32
  }
  func.func @transform_2(%arg0: i32) -> (i32, i32) {
    %c0_i32 = arith.constant 0 : i32
    %c0_i32_0 = arith.constant 0 : i32
    %c0_i32_1 = arith.constant 0 : i32
    return %c0_i32, %c0_i32_0 : i32, i32
  }
  func.func @transform_3(%arg0: i32) -> (i32, i32) {
    %c0_i32 = arith.constant 0 : i32
    %c0_i32_0 = arith.constant 0 : i32
    %c0_i32_1 = arith.constant 0 : i32
    return %c0_i32, %c0_i32_0 : i32, i32
  }
  func.func @transform_4(%arg0: i32) -> (i32, i32) {
    %c0_i32 = arith.constant 0 : i32
    %c0_i32_0 = arith.constant 0 : i32
    %c0_i32_1 = arith.constant 0 : i32
    return %c0_i32, %c0_i32_0 : i32, i32
  }
  func.func @transform_5(%arg0: i32) -> (i32, i32) {
    %c0_i32 = arith.constant 0 : i32
    %c0_i32_0 = arith.constant 0 : i32
    return %arg0, %c0_i32 : i32, i32
  }
}

</mosaic_0001>

<llo_original>
// kernel: tpu_custom_call.1
$region0: #{tpu_custom_call.1}
  #allocation0 [shape = 'u32[]', space=smem, size = 0x4, offset = 0x4, fixed_abs, tag = 'smem constant byte address 0x4 - core index']
  #allocation1 [shape = 'u32[72,128]{1,0:T(1,128)}', space=vmem, size = 0x9000, scoped, tag = 'internal scratch']
  %s0 = inlined_call_operand.hbm [shape: bf16[512,128], index: 0, kind: input, shape index: {}]
  %s1 = inlined_call_operand.hbm [shape: bf16[128,128], index: 1, kind: input, shape index: {}]
  %s2 = inlined_call_operand.vmem [shape: f32[1,128], index: 2, kind: input, shape index: {}]
  %s3 = inlined_call_operand.hbm [shape: bf16[128,128], index: 3, kind: input, shape index: {}]
  %s4 = inlined_call_operand.vmem [shape: f32[1,128], index: 4, kind: input, shape index: {}]
  %s5 = inlined_call_operand.hbm [shape: bf16[512,128], index: 5, kind: output, shape index: {}]
  %s6 = sld [smem:[#allocation0]]
  $region42: #{tpu_custom_call.1} parent=0
    _
  %s8 = ssub.s32 1, %s6
  %s9 = scalar_select 0, %s8, %s6
  $region1: #{tpu_custom_call.1} parent=0
    #allocation2 [shape = 'u8[131072]{0}', space=vmem, size = 0x20000, scoped, tag = 'input window, operand 0, single buffered']
    #allocation3 [shape = 's32[1]{0}', space=sflag, size = 0x4, scoped, tag = 'scoped memory for tpu_custom_call.1']
    #allocation4 [shape = 's32[1]{0}', space=sflag, size = 0x4, scoped, tag = 'scoped memory for tpu_custom_call.1']
    #allocation5 [shape = 'u8[32768]{0}', space=vmem, size = 0x8000, scoped, tag = 'input window, operand 1, single buffered']
    #allocation6 [shape = 's32[1]{0}', space=sflag, size = 0x4, scoped, tag = 'scoped memory for tpu_custom_call.1']
    #allocation7 [shape = 'u8[32768]{0}', space=vmem, size = 0x8000, scoped, tag = 'input window, operand 3, single buffered']
    #allocation8 [shape = 'u8[131072]{0}', space=vmem, size = 0x20000, scoped, tag = 'output window, operand 0, single buffered']
    %10 = vsyncpa [#allocation3], 0
    %11 = vsyncpa [#allocation6], 0
    %12 = vsyncpa [#allocation4], 0
    // Predicated region
    $region2: #{tpu_custom_call.1} parent=1 // pred_check
      _
    $region3: #{tpu_custom_call.1} parent=1 // pred_check_branch
      %14 = sbr.rel (0) target = $region5
    $region4: #{tpu_custom_call.1} parent=1 // pred_region
      %16 = vsyncadd [#allocation3], 0
      %s17 = sshll.u32 %s0, 4
      %s18 = int_to_ptr.hbm [resolvable:$true] %s17
      %s19 = sshll.u32 [#allocation2], 4
      %s20 = int_to_ptr.vmem [resolvable:$true] %s19
      %25 = dma.hbm_to_vmem [thread:$0]  %s18, 4096, %s20, [#allocation3], 64, 64, 4
    $region5: #{tpu_custom_call.1} parent=1 // pred_fallthru
      _
    // Predicated region
    $region6: #{tpu_custom_call.1} parent=1 // pred_check
      _
    $region7: #{tpu_custom_call.1} parent=1 // pred_check_branch
      %27 = sbr.rel (0) target = $region9
    $region8: #{tpu_custom_call.1} parent=1 // pred_region
      %29 = vsyncadd [#allocation6], 0
      %s30 = sshll.u32 %s1, 4
      %s31 = int_to_ptr.hbm [resolvable:$true] %s30
      %s32 = sshll.u32 [#allocation5], 4
      %s33 = int_to_ptr.vmem [resolvable:$true] %s32
      %38 = dma.hbm_to_vmem [thread:$0]  %s31, 1024, %s33, [#allocation6], 64, 64, 4
    $region9: #{tpu_custom_call.1} parent=1 // pred_fallthru
      _
    // Predicated region
    $region10: #{tpu_custom_call.1} parent=1 // pred_check
      _
    $region11: #{tpu_custom_call.1} parent=1 // pred_check_branch
      %40 = sbr.rel (0) target = $region13
    $region12: #{tpu_custom_call.1} parent=1 // pred_region
      _
    $region13: #{tpu_custom_call.1} parent=1 // pred_fallthru
      _
    // Predicated region
    $region14: #{tpu_custom_call.1} parent=1 // pred_check
      _
    $region15: #{tpu_custom_call.1} parent=1 // pred_check_branch
      %42 = sbr.rel (0) target = $region17
    $region16: #{tpu_custom_call.1} parent=1 // pred_region
      %44 = vsyncadd [#allocation6], 0
      %s45 = sshll.u32 %s3, 4
      %s46 = int_to_ptr.hbm [resolvable:$true] %s45
      %s47 = sshll.u32 [#allocation7], 4
      %s48 = int_to_ptr.vmem [resolvable:$true] %s47
      %53 = dma.hbm_to_vmem [thread:$0]  %s46, 1024, %s48, [#allocation6], 64, 64, 4
    $region17: #{tpu_custom_call.1} parent=1 // pred_fallthru
      _
    // Predicated region
    $region18: #{tpu_custom_call.1} parent=1 // pred_check
      _
    $region19: #{tpu_custom_call.1} parent=1 // pred_check_branch
      %55 = sbr.rel (0) target = $region21
    $region20: #{tpu_custom_call.1} parent=1 // pred_region
      _
    $region21: #{tpu_custom_call.1} parent=1 // pred_fallthru
      _
    // Predicated region
    $region22: #{tpu_custom_call.1} parent=1 // pred_check
      _
    $region23: #{tpu_custom_call.1} parent=1 // pred_check_branch
      %57 = sbr.rel (0) target = $region25
    $region24: #{tpu_custom_call.1} parent=1 // pred_region
      %59 = dma.done [#allocation3], 4096
    $region25: #{tpu_custom_call.1} parent=1 // pred_fallthru
      _
    // Predicated region
    $region26: #{tpu_custom_call.1} parent=1 // pred_check
      _
    $region27: #{tpu_custom_call.1} parent=1 // pred_check_branch
      %61 = sbr.rel (0) target = $region29
    $region28: #{tpu_custom_call.1} parent=1 // pred_region
      %63 = dma.done [#allocation6], 1024
    $region29: #{tpu_custom_call.1} parent=1 // pred_fallthru
      _
    // Predicated region
    $region30: #{tpu_custom_call.1} parent=1 // pred_check
      _
    $region31: #{tpu_custom_call.1} parent=1 // pred_check_branch
      %65 = sbr.rel (0) target = $region33
    $region32: #{tpu_custom_call.1} parent=1 // pred_region
      %67 = dma.done [#allocation6], 1024
    $region33: #{tpu_custom_call.1} parent=1 // pred_fallthru
      _
    %v68 = vld [vmem:[#allocation2] sm:$0xf]
    %v69 = vld [vmem:[#allocation2 + $0x4] sm:$0xf]
    %v70 = vld [vmem:[#allocation2 + $0x8] sm:$0xf]
    %v71 = vld [vmem:[#allocation2 + $0xc] sm:$0xf]
    %v72 = vld [vmem:[#allocation2 + $0x10] sm:$0xf]
    %v73 = vld [vmem:[#allocation2 + $0x14] sm:$0xf]
    %v74 = vld [vmem:[#allocation2 + $0x18] sm:$0xf]
    %v75 = vld [vmem:[#allocation2 + $0x1c] sm:$0xf]
    %v76 = vld [vmem:[#allocation2 + $0x20] sm:$0xf]
    %v77 = vld [vmem:[#allocation2 + $0x24] sm:$0xf]
    %v78 = vld [vmem:[#allocation2 + $0x28] sm:$0xf]
    %v79 = vld [vmem:[#allocation2 + $0x2c] sm:$0xf]
    %v80 = vld [vmem:[#allocation2 + $0x30] sm:$0xf]
    %v81 = vld [vmem:[#allocation2 + $0x34] sm:$0xf]
    %v82 = vld [vmem:[#allocation2 + $0x38] sm:$0xf]
    %v83 = vld [vmem:[#allocation2 + $0x3c] sm:$0xf]
    %v84 = vld [vmem:[#allocation2 + $0x40] sm:$0xf]
    %v85 = vld [vmem:[#allocation2 + $0x44] sm:$0xf]
    %v86 = vld [vmem:[#allocation2 + $0x48] sm:$0xf]
    %v87 = vld [vmem:[#allocation2 + $0x4c] sm:$0xf]
    %v88 = vld [vmem:[#allocation2 + $0x50] sm:$0xf]
    %v89 = vld [vmem:[#allocation2 + $0x54] sm:$0xf]
    %v90 = vld [vmem:[#allocation2 + $0x58] sm:$0xf]
    %v91 = vld [vmem:[#allocation2 + $0x5c] sm:$0xf]
    %v92 = vld [vmem:[#allocation2 + $0x60] sm:$0xf]
    %v93 = vld [vmem:[#allocation2 + $0x64] sm:$0xf]
    %v94 = vld [vmem:[#allocation2 + $0x68] sm:$0xf]
    %v95 = vld [vmem:[#allocation2 + $0x6c] sm:$0xf]
    %v96 = vld [vmem:[#allocation2 + $0x70] sm:$0xf]
    %v97 = vld [vmem:[#allocation2 + $0x74] sm:$0xf]
    %v98 = vld [vmem:[#allocation2 + $0x78] sm:$0xf]
    %v99 = vld [vmem:[#allocation2 + $0x7c] sm:$0xf]
    %v100 = vld [vmem:[#allocation2 + $0x80] sm:$0xf]
    %v101 = vld [vmem:[#allocation2 + $0x84] sm:$0xf]
    %v102 = vld [vmem:[#allocation2 + $0x88] sm:$0xf]
    %v103 = vld [vmem:[#allocation2 + $0x8c] sm:$0xf]
    %v104 = vld [vmem:[#allocation2 + $0x90] sm:$0xf]
    %v105 = vld [vmem:[#allocation2 + $0x94] sm:$0xf]
    %v106 = vld [vmem:[#allocation2 + $0x98] sm:$0xf]
    %v107 = vld [vmem:[#allocation2 + $0x9c] sm:$0xf]
    %v108 = vld [vmem:[#allocation2 + $0xa0] sm:$0xf]
    %v109 = vld [vmem:[#allocation2 + $0xa4] sm:$0xf]
    %v110 = vld [vmem:[#allocation2 + $0xa8] sm:$0xf]
    %v111 = vld [vmem:[#allocation2 + $0xac] sm:$0xf]
    %v112 = vld [vmem:[#allocation2 + $0xb0] sm:$0xf]
    %v113 = vld [vmem:[#allocation2 + $0xb4] sm:$0xf]
    %v114 = vld [vmem:[#allocation2 + $0xb8] sm:$0xf]
    %v115 = vld [vmem:[#allocation2 + $0xbc] sm:$0xf]
    %v116 = vld [vmem:[#allocation2 + $0xc0] sm:$0xf]
    %v117 = vld [vmem:[#allocation2 + $0xc4] sm:$0xf]
    %v118 = vld [vmem:[#allocation2 + $0xc8] sm:$0xf]
    %v119 = vld [vmem:[#allocation2 + $0xcc] sm:$0xf]
    %v120 = vld [vmem:[#allocation2 + $0xd0] sm:$0xf]
    %v121 = vld [vmem:[#allocation2 + $0xd4] sm:$0xf]
    %v122 = vld [vmem:[#allocation2 + $0xd8] sm:$0xf]
    %v123 = vld [vmem:[#allocation2 + $0xdc] sm:$0xf]
    %v124 = vld [vmem:[#allocation2 + $0xe0] sm:$0xf]
    %v125 = vld [vmem:[#allocation2 + $0xe4] sm:$0xf]
    %v126 = vld [vmem:[#allocation2 + $0xe8] sm:$0xf]
    %v127 = vld [vmem:[#allocation2 + $0xec] sm:$0xf]
    %v128 = vld [vmem:[#allocation2 + $0xf0] sm:$0xf]
    %v129 = vld [vmem:[#allocation2 + $0xf4] sm:$0xf]
    %v130 = vld [vmem:[#allocation2 + $0xf8] sm:$0xf]
    %v131 = vld [vmem:[#allocation2 + $0xfc] sm:$0xf]
    %v132 = vld [vmem:[#allocation5] sm:$0xf]
    %v133 = vld [vmem:[#allocation5 + $0x4] sm:$0xf]
    %v134 = vld [vmem:[#allocation5 + $0x8] sm:$0xf]
    %v135 = vld [vmem:[#allocation5 + $0xc] sm:$0xf]
    %v136 = vld [vmem:[#allocation5 + $0x10] sm:$0xf]
    %v137 = vld [vmem:[#allocation5 + $0x14] sm:$0xf]
    %v138 = vld [vmem:[#allocation5 + $0x18] sm:$0xf]
    %v139 = vld [vmem:[#allocation5 + $0x1c] sm:$0xf]
    %v140 = vld [vmem:[#allocation5 + $0x20] sm:$0xf]
    %v141 = vld [vmem:[#allocation5 + $0x24] sm:$0xf]
    %v142 = vld [vmem:[#allocation5 + $0x28] sm:$0xf]
    %v143 = vld [vmem:[#allocation5 + $0x2c] sm:$0xf]
    %v144 = vld [vmem:[#allocation5 + $0x30] sm:$0xf]
    %v145 = vld [vmem:[#allocation5 + $0x34] sm:$0xf]
    %v146 = vld [vmem:[#allocation5 + $0x38] sm:$0xf]
    %v147 = vld [vmem:[#allocation5 + $0x3c] sm:$0xf]
    %v148 = vld [vmem:[%s2] sm:$0x1]
    %v150 = vperm.slane %v148, 0
    %v216 = vunpack.c.l.b16 %v68
    %v217 = vunpack.c.l.b16 %v69
    %v218 = vunpack.c.l.b16 %v70
    %v219 = vunpack.c.l.b16 %v71
    %v220 = vunpack.c.l.b16 %v72
    %v221 = vunpack.c.l.b16 %v73
    %v222 = vunpack.c.l.b16 %v74
    %v223 = vunpack.c.l.b16 %v75
    %v224 = vunpack.c.l.b16 %v76
    %v225 = vunpack.c.l.b16 %v77
    %v226 = vunpack.c.l.b16 %v78
    %v227 = vunpack.c.l.b16 %v79
    %v228 = vunpack.c.l.b16 %v80
    %v229 = vunpack.c.l.b16 %v81
    %v230 = vunpack.c.l.b16 %v82
    %v231 = vunpack.c.l.b16 %v83
    %v232 = vunpack.c.l.b16 %v84
    %v233 = vunpack.c.l.b16 %v85
    %v234 = vunpack.c.l.b16 %v86
    %v235 = vunpack.c.l.b16 %v87
    %v236 = vunpack.c.l.b16 %v88
    %v237 = vunpack.c.l.b16 %v89
    %v238 = vunpack.c.l.b16 %v90
    %v239 = vunpack.c.l.b16 %v91
    %v240 = vunpack.c.l.b16 %v92
    %v241 = vunpack.c.l.b16 %v93
    %v242 = vunpack.c.l.b16 %v94
    %v243 = vunpack.c.l.b16 %v95
    %v244 = vunpack.c.l.b16 %v96
    %v245 = vunpack.c.l.b16 %v97
    %v246 = vunpack.c.l.b16 %v98
    %v247 = vunpack.c.l.b16 %v99
    %v248 = vunpack.c.l.b16 %v100
    %v249 = vunpack.c.l.b16 %v101
    %v250 = vunpack.c.l.b16 %v102
    %v251 = vunpack.c.l.b16 %v103
    %v252 = vunpack.c.l.b16 %v104
    %v253 = vunpack.c.l.b16 %v105
    %v254 = vunpack.c.l.b16 %v106
    %v255 = vunpack.c.l.b16 %v107
    %v256 = vunpack.c.l.b16 %v108
    %v257 = vunpack.c.l.b16 %v109
    %v258 = vunpack.c.l.b16 %v110
    %v259 = vunpack.c.l.b16 %v111
    %v260 = vunpack.c.l.b16 %v112
    %v261 = vunpack.c.l.b16 %v113
    %v262 = vunpack.c.l.b16 %v114
    %v263 = vunpack.c.l.b16 %v115
    %v264 = vunpack.c.l.b16 %v116
    %v265 = vunpack.c.l.b16 %v117
    %v266 = vunpack.c.l.b16 %v118
    %v267 = vunpack.c.l.b16 %v119
    %v268 = vunpack.c.l.b16 %v120
    %v269 = vunpack.c.l.b16 %v121
    %v270 = vunpack.c.l.b16 %v122
    %v271 = vunpack.c.l.b16 %v123
    %v272 = vunpack.c.l.b16 %v124
    %v273 = vunpack.c.l.b16 %v125
    %v274 = vunpack.c.l.b16 %v126
    %v275 = vunpack.c.l.b16 %v127
    %v276 = vunpack.c.l.b16 %v128
    %v277 = vunpack.c.l.b16 %v129
    %v278 = vunpack.c.l.b16 %v130
    %v279 = vunpack.c.l.b16 %v131
    %v280 = vpack.c.b16 %v217, %v216
    %v281 = vpack.c.b16 %v219, %v218
    %v282 = vpack.c.b16 %v221, %v220
    %v283 = vpack.c.b16 %v223, %v222
    %v284 = vpack.c.b16 %v225, %v224
    %v285 = vpack.c.b16 %v227, %v226
    %v286 = vpack.c.b16 %v229, %v228
    %v287 = vpack.c.b16 %v231, %v230
    %v288 = vpack.c.b16 %v233, %v232
    %v289 = vpack.c.b16 %v235, %v234
    %v290 = vpack.c.b16 %v237, %v236
    %v291 = vpack.c.b16 %v239, %v238
    %v292 = vpack.c.b16 %v241, %v240
    %v293 = vpack.c.b16 %v243, %v242
    %v294 = vpack.c.b16 %v245, %v244
    %v295 = vpack.c.b16 %v247, %v246
    %v296 = vpack.c.b16 %v249, %v248
    %v297 = vpack.c.b16 %v251, %v250
    %v298 = vpack.c.b16 %v253, %v252
    %v299 = vpack.c.b16 %v255, %v254
    %v300 = vpack.c.b16 %v257, %v256
    %v301 = vpack.c.b16 %v259, %v258
    %v302 = vpack.c.b16 %v261, %v260
    %v303 = vpack.c.b16 %v263, %v262
    %v304 = vpack.c.b16 %v265, %v264
    %v305 = vpack.c.b16 %v267, %v266
    %v306 = vpack.c.b16 %v269, %v268
    %v307 = vpack.c.b16 %v271, %v270
    %v308 = vpack.c.b16 %v273, %v272
    %v309 = vpack.c.b16 %v275, %v274
    %v310 = vpack.c.b16 %v277, %v276
    %v311 = vpack.c.b16 %v279, %v278
    %v360 = vunpack.c.l.b16 %v132
    %v361 = vunpack.c.l.b16 %v133
    %v362 = vunpack.c.l.b16 %v134
    %v363 = vunpack.c.l.b16 %v135
    %v364 = vunpack.c.l.b16 %v136
    %v365 = vunpack.c.l.b16 %v137
    %v366 = vunpack.c.l.b16 %v138
    %v367 = vunpack.c.l.b16 %v139
    %v368 = vunpack.c.l.b16 %v140
    %v369 = vunpack.c.l.b16 %v141
    %v370 = vunpack.c.l.b16 %v142
    %v371 = vunpack.c.l.b16 %v143
    %v372 = vunpack.c.l.b16 %v144
    %v373 = vunpack.c.l.b16 %v145
    %v374 = vunpack.c.l.b16 %v146
    %v375 = vunpack.c.l.b16 %v147
    %v376 = vpack.c.b16 %v361, %v360
    %v377 = vpack.c.b16 %v363, %v362
    %v378 = vpack.c.b16 %v365, %v364
    %v379 = vpack.c.b16 %v367, %v366
    %v380 = vpack.c.b16 %v369, %v368
    %v381 = vpack.c.b16 %v371, %v370
    %v382 = vpack.c.b16 %v373, %v372
    %v383 = vpack.c.b16 %v375, %v374
    %392 = vmatpush.bf16.msra.mxu0 %v383
    %393 = vmatpush.bf16.msra.mxu0 %v382
    %394 = vmatpush.bf16.msra.mxu0 %v381
    %395 = vmatpush.bf16.msra.mxu0 %v380
    %396 = vmatpush.bf16.msra.mxu0 %v379
    %397 = vmatpush.bf16.msra.mxu0 %v378
    %398 = vmatpush.bf16.msra.mxu0 %v377
    %399 = vmatpush.bf16.msra.mxu0 %v376
    %400 = vmatmul.bf16.gmra.mxu0 %v280
    %v401 = vpop.f32.mrf.mxu0
    %v402 = vadd.f32 %v150, %v401
    %v403 = vpop.f32.mrf.mxu0
    %v404 = vadd.f32 %v150, %v403
    %405 = vmatmul.bf16.gmra.mxu0 %v281
    %v406 = vpop.f32.mrf.mxu0
    %v407 = vadd.f32 %v150, %v406
    %v408 = vpop.f32.mrf.mxu0
    %v409 = vadd.f32 %v150, %v408
    %410 = vmatmul.bf16.gmra.mxu0 %v282
    %v411 = vpop.f32.mrf.mxu0
    %v412 = vadd.f32 %v150, %v411
    %v413 = vpop.f32.mrf.mxu0
    %v414 = vadd.f32 %v150, %v413
    %415 = vmatmul.bf16.gmra.mxu0 %v283
    %v416 = vpop.f32.mrf.mxu0
    %v417 = vadd.f32 %v150, %v416
    %v418 = vpop.f32.mrf.mxu0
    %v419 = vadd.f32 %v150, %v418
    %420 = vmatmul.bf16.gmra.mxu0 %v284
    %v421 = vpop.f32.mrf.mxu0
    %v422 = vadd.f32 %v150, %v421
    %v423 = vpop.f32.mrf.mxu0
    %v424 = vadd.f32 %v150, %v423
    %425 = vmatmul.bf16.gmra.mxu0 %v285
    %v426 = vpop.f32.mrf.mxu0
    %v427 = vadd.f32 %v150, %v426
    %v428 = vpop.f32.mrf.mxu0
    %v429 = vadd.f32 %v150, %v428
    %430 = vmatmul.bf16.gmra.mxu0 %v286
    %v431 = vpop.f32.mrf.mxu0
    %v432 = vadd.f32 %v150, %v431
    %v433 = vpop.f32.mrf.mxu0
    %v434 = vadd.f32 %v150, %v433
    %435 = vmatmul.bf16.gmra.mxu0 %v287
    %v436 = vpop.f32.mrf.mxu0
    %v437 = vadd.f32 %v150, %v436
    %v438 = vpop.f32.mrf.mxu0
    %v439 = vadd.f32 %v150, %v438
    %440 = vmatmul.bf16.gmra.mxu0 %v288
    %v441 = vpop.f32.mrf.mxu0
    %v442 = vadd.f32 %v150, %v441
    %v443 = vpop.f32.mrf.mxu0
    %v444 = vadd.f32 %v150, %v443
    %445 = vmatmul.bf16.gmra.mxu0 %v289
    %v446 = vpop.f32.mrf.mxu0
    %v447 = vadd.f32 %v150, %v446
    %v448 = vpop.f32.mrf.mxu0
    %v449 = vadd.f32 %v150, %v448
    %450 = vmatmul.bf16.gmra.mxu0 %v290
    %v451 = vpop.f32.mrf.mxu0
    %v452 = vadd.f32 %v150, %v451
    %v453 = vpop.f32.mrf.mxu0
    %v454 = vadd.f32 %v150, %v453
    %455 = vmatmul.bf16.gmra.mxu0 %v291
    %v456 = vpop.f32.mrf.mxu0
    %v457 = vadd.f32 %v150, %v456
    %v458 = vpop.f32.mrf.mxu0
    %v459 = vadd.f32 %v150, %v458
    %460 = vmatmul.bf16.gmra.mxu0 %v292
    %v461 = vpop.f32.mrf.mxu0
    %v462 = vadd.f32 %v150, %v461
    %v463 = vpop.f32.mrf.mxu0
    %v464 = vadd.f32 %v150, %v463
    %465 = vmatmul.bf16.gmra.mxu0 %v293
    %v466 = vpop.f32.mrf.mxu0
    %v467 = vadd.f32 %v150, %v466
    %v468 = vpop.f32.mrf.mxu0
    %v469 = vadd.f32 %v150, %v468
    %470 = vmatmul.bf16.gmra.mxu0 %v294
    %v471 = vpop.f32.mrf.mxu0
    %v472 = vadd.f32 %v150, %v471
    %v473 = vpop.f32.mrf.mxu0
    %v474 = vadd.f32 %v150, %v473
    %475 = vmatmul.bf16.gmra.mxu0 %v295
    %v476 = vpop.f32.mrf.mxu0
    %v477 = vadd.f32 %v150, %v476
    %v478 = vpop.f32.mrf.mxu0
    %v479 = vadd.f32 %v150, %v478
    %480 = vmatmul.bf16.gmra.mxu0 %v296
    %v481 = vpop.f32.mrf.mxu0
    %v482 = vadd.f32 %v150, %v481
    %v483 = vpop.f32.mrf.mxu0
    %v484 = vadd.f32 %v150, %v483
    %485 = vmatmul.bf16.gmra.mxu0 %v297
    %v486 = vpop.f32.mrf.mxu0
    %v487 = vadd.f32 %v150, %v486
    %v488 = vpop.f32.mrf.mxu0
    %v489 = vadd.f32 %v150, %v488
    %490 = vmatmul.bf16.gmra.mxu0 %v298
    %v491 = vpop.f32.mrf.mxu0
    %v492 = vadd.f32 %v150, %v491
    %v493 = vpop.f32.mrf.mxu0
    %v494 = vadd.f32 %v150, %v493
    %495 = vmatmul.bf16.gmra.mxu0 %v299
    %v496 = vpop.f32.mrf.mxu0
    %v497 = vadd.f32 %v150, %v496
    %v498 = vpop.f32.mrf.mxu0
    %v499 = vadd.f32 %v150, %v498
    %500 = vmatmul.bf16.gmra.mxu0 %v300
    %v501 = vpop.f32.mrf.mxu0
    %v502 = vadd.f32 %v150, %v501
    %v503 = vpop.f32.mrf.mxu0
    %v504 = vadd.f32 %v150, %v503
    %505 = vmatmul.bf16.gmra.mxu0 %v301
    %v506 = vpop.f32.mrf.mxu0
    %v507 = vadd.f32 %v150, %v506
    %v508 = vpop.f32.mrf.mxu0
    %v509 = vadd.f32 %v150, %v508
    %510 = vmatmul.bf16.gmra.mxu0 %v302
    %v511 = vpop.f32.mrf.mxu0
    %v512 = vadd.f32 %v150, %v511
    %v513 = vpop.f32.mrf.mxu0
    %v514 = vadd.f32 %v150, %v513
    %515 = vmatmul.bf16.gmra.mxu0 %v303
    %v516 = vpop.f32.mrf.mxu0
    %v517 = vadd.f32 %v150, %v516
    %v518 = vpop.f32.mrf.mxu0
    %v519 = vadd.f32 %v150, %v518
    %520 = vmatmul.bf16.gmra.mxu0 %v304
    %v521 = vpop.f32.mrf.mxu0
    %v522 = vadd.f32 %v150, %v521
    %v523 = vpop.f32.mrf.mxu0
    %v524 = vadd.f32 %v150, %v523
    %525 = vmatmul.bf16.gmra.mxu0 %v305
    %v526 = vpop.f32.mrf.mxu0
    %v527 = vadd.f32 %v150, %v526
    %v528 = vpop.f32.mrf.mxu0
    %v529 = vadd.f32 %v150, %v528
    %530 = vmatmul.bf16.gmra.mxu0 %v306
    %v531 = vpop.f32.mrf.mxu0
    %v532 = vadd.f32 %v150, %v531
    %v533 = vpop.f32.mrf.mxu0
    %v534 = vadd.f32 %v150, %v533
    %535 = vmatmul.bf16.gmra.mxu0 %v307
    %v536 = vpop.f32.mrf.mxu0
    %v537 = vadd.f32 %v150, %v536
    %v538 = vpop.f32.mrf.mxu0
    %v539 = vadd.f32 %v150, %v538
    %540 = vmatmul.bf16.gmra.mxu0 %v308
    %v541 = vpop.f32.mrf.mxu0
    %v542 = vadd.f32 %v150, %v541
    %v543 = vpop.f32.mrf.mxu0
    %v544 = vadd.f32 %v150, %v543
    %545 = vmatmul.bf16.gmra.mxu0 %v309
    %v546 = vpop.f32.mrf.mxu0
    %v547 = vadd.f32 %v150, %v546
    %v548 = vpop.f32.mrf.mxu0
    %v549 = vadd.f32 %v150, %v548
    %550 = vmatmul.bf16.gmra.mxu0 %v310
    %v551 = vpop.f32.mrf.mxu0
    %v552 = vadd.f32 %v150, %v551
    %v553 = vpop.f32.mrf.mxu0
    %v554 = vadd.f32 %v150, %v553
    %555 = vmatmul.bf16.gmra.mxu0 %v311
    %v556 = vpop.f32.mrf.mxu0
    %v557 = vadd.f32 %v150, %v556
    %v558 = vpop.f32.mrf.mxu0
    %v559 = vadd.f32 %v150, %v558
    %560 = vdwg.mxu0
    %v561 = vxor.u32 %v402, 2147483648
    %v562 = vxor.u32 %v404, 2147483648
    %v563 = vxor.u32 %v407, 2147483648
    %v564 = vxor.u32 %v409, 2147483648
    %v565 = vxor.u32 %v412, 2147483648
    %v566 = vxor.u32 %v414, 2147483648
    %v567 = vxor.u32 %v417, 2147483648
    %v568 = vxor.u32 %v419, 2147483648
    %v569 = vxor.u32 %v422, 2147483648
    %v570 = vxor.u32 %v424, 2147483648
    %v571 = vxor.u32 %v427, 2147483648
    %v572 = vxor.u32 %v429, 2147483648
    %v573 = vxor.u32 %v432, 2147483648
    %v574 = vxor.u32 %v434, 2147483648
    %v575 = vxor.u32 %v437, 2147483648
    %v576 = vxor.u32 %v439, 2147483648
    %v577 = vxor.u32 %v442, 2147483648
    %v578 = vxor.u32 %v444, 2147483648
    %v579 = vxor.u32 %v447, 2147483648
    %v580 = vxor.u32 %v449, 2147483648
    %v581 = vxor.u32 %v452, 2147483648
    %v582 = vxor.u32 %v454, 2147483648
    %v583 = vxor.u32 %v457, 2147483648
    %v584 = vxor.u32 %v459, 2147483648
    %v585 = vxor.u32 %v462, 2147483648
    %v586 = vxor.u32 %v464, 2147483648
    %v587 = vxor.u32 %v467, 2147483648
    %v588 = vxor.u32 %v469, 2147483648
    %v589 = vxor.u32 %v472, 2147483648
    %v590 = vxor.u32 %v474, 2147483648
    %v591 = vxor.u32 %v477, 2147483648
    %v592 = vxor.u32 %v479, 2147483648
    %v593 = vxor.u32 %v482, 2147483648
    %v594 = vxor.u32 %v484, 2147483648
    %v595 = vxor.u32 %v487, 2147483648
    %v596 = vxor.u32 %v489, 2147483648
    %v597 = vxor.u32 %v492, 2147483648
    %v598 = vxor.u32 %v494, 2147483648
    %v599 = vxor.u32 %v497, 2147483648
    %v600 = vxor.u32 %v499, 2147483648
    %v601 = vxor.u32 %v502, 2147483648
    %v602 = vxor.u32 %v504, 2147483648
    %v603 = vxor.u32 %v507, 2147483648
    %v604 = vxor.u32 %v509, 2147483648
    %v605 = vxor.u32 %v512, 2147483648
    %v606 = vxor.u32 %v514, 2147483648
    %v607 = vxor.u32 %v517, 2147483648
    %v608 = vxor.u32 %v519, 2147483648
    %v609 = vxor.u32 %v522, 2147483648
    %v610 = vxor.u32 %v524, 2147483648
    %v611 = vxor.u32 %v527, 2147483648
    %v612 = vxor.u32 %v529, 2147483648
    %v613 = vxor.u32 %v532, 2147483648
    %v614 = vxor.u32 %v534, 2147483648
    %v615 = vxor.u32 %v537, 2147483648
    %v616 = vxor.u32 %v539, 2147483648
    %v617 = vxor.u32 %v542, 2147483648
    %v618 = vxor.u32 %v544, 2147483648
    %v619 = vxor.u32 %v547, 2147483648
    %v620 = vxor.u32 %v549, 2147483648
    %v621 = vxor.u32 %v552, 2147483648
    %v622 = vxor.u32 %v554, 2147483648
    %v623 = vxor.u32 %v557, 2147483648
    %v624 = vxor.u32 %v559, 2147483648
    %v625 = vmul.f32 %v561, 1.442695
    %v626 = vpow.pop %v625
    %v627 = vmul.f32 %v562, 1.442695
    %v628 = vpow.pop %v627
    %v629 = vmul.f32 %v563, 1.442695
    %v630 = vpow.pop %v629
    %v631 = vmul.f32 %v564, 1.442695
    %v632 = vpow.pop %v631
    %v633 = vmul.f32 %v565, 1.442695
    %v634 = vpow.pop %v633
    %v635 = vmul.f32 %v566, 1.442695
    %v636 = vpow.pop %v635
    %v637 = vmul.f32 %v567, 1.442695
    %v638 = vpow.pop %v637
    %v639 = vmul.f32 %v568, 1.442695
    %v640 = vpow.pop %v639
    %v641 = vmul.f32 %v569, 1.442695
    %v642 = vpow.pop %v641
    %v643 = vmul.f32 %v570, 1.442695
    %v644 = vpow.pop %v643
    %v645 = vmul.f32 %v571, 1.442695
    %v646 = vpow.pop %v645
    %v647 = vmul.f32 %v572, 1.442695
    %v648 = vpow.pop %v647
    %v649 = vmul.f32 %v573, 1.442695
    %v650 = vpow.pop %v649
    %v651 = vmul.f32 %v574, 1.442695
    %v652 = vpow.pop %v651
    %v653 = vmul.f32 %v575, 1.442695
    %v654 = vpow.pop %v653
    %v655 = vmul.f32 %v576, 1.442695
    %v656 = vpow.pop %v655
    %v657 = vmul.f32 %v577, 1.442695
    %v658 = vpow.pop %v657
    %v659 = vmul.f32 %v578, 1.442695
    %v660 = vpow.pop %v659
    %v661 = vmul.f32 %v579, 1.442695
    %v662 = vpow.pop %v661
    %v663 = vmul.f32 %v580, 1.442695
    %v664 = vpow.pop %v663
    %v665 = vmul.f32 %v581, 1.442695
    %v666 = vpow.pop %v665
    %v667 = vmul.f32 %v582, 1.442695
    %v668 = vpow.pop %v667
    %v669 = vmul.f32 %v583, 1.442695
    %v670 = vpow.pop %v669
    %v671 = vmul.f32 %v584, 1.442695
    %v672 = vpow.pop %v671
    %v673 = vmul.f32 %v585, 1.442695
    %v674 = vpow.pop %v673
    %v675 = vmul.f32 %v586, 1.442695
    %v676 = vpow.pop %v675
    %v677 = vmul.f32 %v587, 1.442695
    %v678 = vpow.pop %v677
    %v679 = vmul.f32 %v588, 1.442695
    %v680 = vpow.pop %v679
    %v681 = vmul.f32 %v589, 1.442695
    %v682 = vpow.pop %v681
    %v683 = vmul.f32 %v590, 1.442695
    %v684 = vpow.pop %v683
    %v685 = vmul.f32 %v591, 1.442695
    %v686 = vpow.pop %v685
    %v687 = vmul.f32 %v592, 1.442695
    %v688 = vpow.pop %v687
    %v689 = vmul.f32 %v593, 1.442695
    %v690 = vpow.pop %v689
    %v691 = vmul.f32 %v594, 1.442695
    %v692 = vpow.pop %v691
    %v693 = vmul.f32 %v595, 1.442695
    %v694 = vpow.pop %v693
    %v695 = vmul.f32 %v596, 1.442695
    %v696 = vpow.pop %v695
    %v697 = vmul.f32 %v597, 1.442695
    %v698 = vpow.pop %v697
    %v699 = vmul.f32 %v598, 1.442695
    %v700 = vpow.pop %v699
    %v701 = vmul.f32 %v599, 1.442695
    %v702 = vpow.pop %v701
    %v703 = vmul.f32 %v600, 1.442695
    %v704 = vpow.pop %v703
    %v705 = vmul.f32 %v601, 1.442695
    %v706 = vpow.pop %v705
    %v707 = vmul.f32 %v602, 1.442695
    %v708 = vpow.pop %v707
    %v709 = vmul.f32 %v603, 1.442695
    %v710 = vpow.pop %v709
    %v711 = vmul.f32 %v604, 1.442695
    %v712 = vpow.pop %v711
    %v713 = vmul.f32 %v605, 1.442695
    %v714 = vpow.pop %v713
    %v715 = vmul.f32 %v606, 1.442695
    %v716 = vpow.pop %v715
    %v717 = vmul.f32 %v607, 1.442695
    %v718 = vpow.pop %v717
    %v719 = vmul.f32 %v608, 1.442695
    %v720 = vpow.pop %v719
    %v721 = vmul.f32 %v609, 1.442695
    %v722 = vpow.pop %v721
    %v723 = vmul.f32 %v610, 1.442695
    %v724 = vpow.pop %v723
    %v725 = vmul.f32 %v611, 1.442695
    %v726 = vpow.pop %v725
    %v727 = vmul.f32 %v612, 1.442695
    %v728 = vpow.pop %v727
    %v729 = vmul.f32 %v613, 1.442695
    %v730 = vpow.pop %v729
    %v731 = vmul.f32 %v614, 1.442695
    %v732 = vpow.pop %v731
    %v733 = vmul.f32 %v615, 1.442695
    %v734 = vpow.pop %v733
    %v735 = vmul.f32 %v616, 1.442695
    %v736 = vpow.pop %v735
    %v737 = vmul.f32 %v617, 1.442695
    %v738 = vpow.pop %v737
    %v739 = vmul.f32 %v618, 1.442695
    %v740 = vpow.pop %v739
    %v741 = vmul.f32 %v619, 1.442695
    %v742 = vpow.pop %v741
    %v743 = vmul.f32 %v620, 1.442695
    %v744 = vpow.pop %v743
    %v745 = vmul.f32 %v621, 1.442695
    %v746 = vpow.pop %v745
    %v747 = vmul.f32 %v622, 1.442695
    %v748 = vpow.pop %v747
    %v749 = vmul.f32 %v623, 1.442695
    %v750 = vpow.pop %v749
    %v751 = vmul.f32 %v624, 1.442695
    %v752 = vpow.pop %v751
    %v753 = vadd.f32 %v626, 1.0
    %v754 = vadd.f32 %v628, 1.0
    %v755 = vadd.f32 %v630, 1.0
    %v756 = vadd.f32 %v632, 1.0
    %v757 = vadd.f32 %v634, 1.0
    %v758 = vadd.f32 %v636, 1.0
    %v759 = vadd.f32 %v638, 1.0
    %v760 = vadd.f32 %v640, 1.0
    %v761 = vadd.f32 %v642, 1.0
    %v762 = vadd.f32 %v644, 1.0
    %v763 = vadd.f32 %v646, 1.0
    %v764 = vadd.f32 %v648, 1.0
    %v765 = vadd.f32 %v650, 1.0
    %v766 = vadd.f32 %v652, 1.0
    %v767 = vadd.f32 %v654, 1.0
    %v768 = vadd.f32 %v656, 1.0
    %v769 = vadd.f32 %v658, 1.0
    %v770 = vadd.f32 %v660, 1.0
    %v771 = vadd.f32 %v662, 1.0
    %v772 = vadd.f32 %v664, 1.0
    %v773 = vadd.f32 %v666, 1.0
    %v774 = vadd.f32 %v668, 1.0
    %v775 = vadd.f32 %v670, 1.0
    %v776 = vadd.f32 %v672, 1.0
    %v777 = vadd.f32 %v674, 1.0
    %v778 = vadd.f32 %v676, 1.0
    %v779 = vadd.f32 %v678, 1.0
    %v780 = vadd.f32 %v680, 1.0
    %v781 = vadd.f32 %v682, 1.0
    %v782 = vadd.f32 %v684, 1.0
    %v783 = vadd.f32 %v686, 1.0
    %v784 = vadd.f32 %v688, 1.0
    %v785 = vadd.f32 %v690, 1.0
    %v786 = vadd.f32 %v692, 1.0
    %v787 = vadd.f32 %v694, 1.0
    %v788 = vadd.f32 %v696, 1.0
    %v789 = vadd.f32 %v698, 1.0
    %v790 = vadd.f32 %v700, 1.0
    %v791 = vadd.f32 %v702, 1.0
    %v792 = vadd.f32 %v704, 1.0
    %v793 = vadd.f32 %v706, 1.0
    %v794 = vadd.f32 %v708, 1.0
    %v795 = vadd.f32 %v710, 1.0
    %v796 = vadd.f32 %v712, 1.0
    %v797 = vadd.f32 %v714, 1.0
    %v798 = vadd.f32 %v716, 1.0
    %v799 = vadd.f32 %v718, 1.0
    %v800 = vadd.f32 %v720, 1.0
    %v801 = vadd.f32 %v722, 1.0
    %v802 = vadd.f32 %v724, 1.0
    %v803 = vadd.f32 %v726, 1.0
    %v804 = vadd.f32 %v728, 1.0
    %v805 = vadd.f32 %v730, 1.0
    %v806 = vadd.f32 %v732, 1.0
    %v807 = vadd.f32 %v734, 1.0
    %v808 = vadd.f32 %v736, 1.0
    %v809 = vadd.f32 %v738, 1.0
    %v810 = vadd.f32 %v740, 1.0
    %v811 = vadd.f32 %v742, 1.0
    %v812 = vadd.f32 %v744, 1.0
    %v813 = vadd.f32 %v746, 1.0
    %v814 = vadd.f32 %v748, 1.0
    %v815 = vadd.f32 %v750, 1.0
    %v816 = vadd.f32 %v752, 1.0
    %v817 = vrcp.pop %v753
    %v818 = vmul.f32 %v753, %v817
    %v819 = vsub.f32 1.0, %v818
    %v820 = vmul.f32 %v817, %v819
    %v821 = vadd.f32 %v817, %v820
    %vm822 = vweird.f32 %v753
    %vm823 = vweird.f32 %v817
    %vm824 = vmor %vm822, %vm823
    %v825 = vsel %vm824, %v817, %v821
    %v826 = vand.u32 2147483647, %v753
    %vm827 = vcmp.eq.f32.partialorder %v826, 8.507059e+37
    %v828 = vand.u32 %v753, 2147483648
    %v829 = vor.u32 1.1754944e-38, %v828
    %v830 = vsel %vm827, %v829, %v825
    %v831 = vmul.f32 1.0, %v830
    %v832 = vrcp.pop %v754
    %v833 = vmul.f32 %v754, %v832
    %v834 = vsub.f32 1.0, %v833
    %v835 = vmul.f32 %v832, %v834
    %v836 = vadd.f32 %v832, %v835
    %vm837 = vweird.f32 %v754
    %vm838 = vweird.f32 %v832
    %vm839 = vmor %vm837, %vm838
    %v840 = vsel %vm839, %v832, %v836
    %v841 = vand.u32 2147483647, %v754
    %vm842 = vcmp.eq.f32.partialorder %v841, 8.507059e+37
    %v843 = vand.u32 %v754, 2147483648
    %v844 = vor.u32 1.1754944e-38, %v843
    %v845 = vsel %vm842, %v844, %v840
    %v846 = vmul.f32 1.0, %v845
    %v847 = vrcp.pop %v755
    %v848 = vmul.f32 %v755, %v847
    %v849 = vsub.f32 1.0, %v848
    %v850 = vmul.f32 %v847, %v849
    %v851 = vadd.f32 %v847, %v850
    %vm852 = vweird.f32 %v755
    %vm853 = vweird.f32 %v847
    %vm854 = vmor %vm852, %vm853
    %v855 = vsel %vm854, %v847, %v851
    %v856 = vand.u32 2147483647, %v755
    %vm857 = vcmp.eq.f32.partialorder %v856, 8.507059e+37
    %v858 = vand.u32 %v755, 2147483648
    %v859 = vor.u32 1.1754944e-38, %v858
    %v860 = vsel %vm857, %v859, %v855
    %v861 = vmul.f32 1.0, %v860
    %v862 = vrcp.pop %v756
    %v863 = vmul.f32 %v756, %v862
    %v864 = vsub.f32 1.0, %v863
    %v865 = vmul.f32 %v862, %v864
    %v866 = vadd.f32 %v862, %v865
    %vm867 = vweird.f32 %v756
    %vm868 = vweird.f32 %v862
    %vm869 = vmor %vm867, %vm868
    %v870 = vsel %vm869, %v862, %v866
    %v871 = vand.u32 2147483647, %v756
    %vm872 = vcmp.eq.f32.partialorder %v871, 8.507059e+37
    %v873 = vand.u32 %v756, 2147483648
    %v874 = vor.u32 1.1754944e-38, %v873
    %v875 = vsel %vm872, %v874, %v870
    %v876 = vmul.f32 1.0, %v875
    %v877 = vrcp.pop %v757
    %v878 = vmul.f32 %v757, %v877
    %v879 = vsub.f32 1.0, %v878
    %v880 = vmul.f32 %v877, %v879
    %v881 = vadd.f32 %v877, %v880
    %vm882 = vweird.f32 %v757
    %vm883 = vweird.f32 %v877
    %vm884 = vmor %vm882, %vm883
    %v885 = vsel %vm884, %v877, %v881
    %v886 = vand.u32 2147483647, %v757
    %vm887 = vcmp.eq.f32.partialorder %v886, 8.507059e+37
    %v888 = vand.u32 %v757, 2147483648
    %v889 = vor.u32 1.1754944e-38, %v888
    %v890 = vsel %vm887, %v889, %v885
    %v891 = vmul.f32 1.0, %v890
    %v892 = vrcp.pop %v758
    %v893 = vmul.f32 %v758, %v892
    %v894 = vsub.f32 1.0, %v893
    %v895 = vmul.f32 %v892, %v894
    %v896 = vadd.f32 %v892, %v895
    %vm897 = vweird.f32 %v758
    %vm898 = vweird.f32 %v892
    %vm899 = vmor %vm897, %vm898
    %v900 = vsel %vm899, %v892, %v896
    %v901 = vand.u32 2147483647, %v758
    %vm902 = vcmp.eq.f32.partialorder %v901, 8.507059e+37
    %v903 = vand.u32 %v758, 2147483648
    %v904 = vor.u32 1.1754944e-38, %v903
    %v905 = vsel %vm902, %v904, %v900
    %v906 = vmul.f32 1.0, %v905
    %v907 = vrcp.pop %v759
    %v908 = vmul.f32 %v759, %v907
    %v909 = vsub.f32 1.0, %v908
    %v910 = vmul.f32 %v907, %v909
    %v911 = vadd.f32 %v907, %v910
    %vm912 = vweird.f32 %v759
    %vm913 = vweird.f32 %v907
    %vm914 = vmor %vm912, %vm913
    %v915 = vsel %vm914, %v907, %v911
    %v916 = vand.u32 2147483647, %v759
    %vm917 = vcmp.eq.f32.partialorder %v916, 8.507059e+37
    %v918 = vand.u32 %v759, 2147483648
    %v919 = vor.u32 1.1754944e-38, %v918
    %v920 = vsel %vm917, %v919, %v915
    %v921 = vmul.f32 1.0, %v920
    %v922 = vrcp.pop %v760
    %v923 = vmul.f32 %v760, %v922
    %v924 = vsub.f32 1.0, %v923
    %v925 = vmul.f32 %v922, %v924
    %v926 = vadd.f32 %v922, %v925
    %vm927 = vweird.f32 %v760
    %vm928 = vweird.f32 %v922
    %vm929 = vmor %vm927, %vm928
    %v930 = vsel %vm929, %v922, %v926
    %v931 = vand.u32 2147483647, %v760
    %vm932 = vcmp.eq.f32.partialorder %v931, 8.507059e+37
    %v933 = vand.u32 %v760, 2147483648
    %v934 = vor.u32 1.1754944e-38, %v933
    %v935 = vsel %vm932, %v934, %v930
    %v936 = vmul.f32 1.0, %v935
    %v937 = vrcp.pop %v761
    %v938 = vmul.f32 %v761, %v937
    %v939 = vsub.f32 1.0, %v938
    %v940 = vmul.f32 %v937, %v939
    %v941 = vadd.f32 %v937, %v940
    %vm942 = vweird.f32 %v761
    %vm943 = vweird.f32 %v937
    %vm944 = vmor %vm942, %vm943
    %v945 = vsel %vm944, %v937, %v941
    %v946 = vand.u32 2147483647, %v761
    %vm947 = vcmp.eq.f32.partialorder %v946, 8.507059e+37
    %v948 = vand.u32 %v761, 2147483648
    %v949 = vor.u32 1.1754944e-38, %v948
    %v950 = vsel %vm947, %v949, %v945
    %v951 = vmul.f32 1.0, %v950
    %v952 = vrcp.pop %v762
    %v953 = vmul.f32 %v762, %v952
    %v954 = vsub.f32 1.0, %v953
    %v955 = vmul.f32 %v952, %v954
    %v956 = vadd.f32 %v952, %v955
    %vm957 = vweird.f32 %v762
    %vm958 = vweird.f32 %v952
    %vm959 = vmor %vm957, %vm958
    %v960 = vsel %vm959, %v952, %v956
    %v961 = vand.u32 2147483647, %v762
    %vm962 = vcmp.eq.f32.partialorder %v961, 8.507059e+37
    %v963 = vand.u32 %v762, 2147483648
    %v964 = vor.u32 1.1754944e-38, %v963
    %v965 = vsel %vm962, %v964, %v960
    %v966 = vmul.f32 1.0, %v965
    %v967 = vrcp.pop %v763
    %v968 = vmul.f32 %v763, %v967
    %v969 = vsub.f32 1.0, %v968
    %v970 = vmul.f32 %v967, %v969
    %v971 = vadd.f32 %v967, %v970
    %vm972 = vweird.f32 %v763
    %vm973 = vweird.f32 %v967
    %vm974 = vmor %vm972, %vm973
    %v975 = vsel %vm974, %v967, %v971
    %v976 = vand.u32 2147483647, %v763
    %vm977 = vcmp.eq.f32.partialorder %v976, 8.507059e+37
    %v978 = vand.u32 %v763, 2147483648
    %v979 = vor.u32 1.1754944e-38, %v978
    %v980 = vsel %vm977, %v979, %v975
    %v981 = vmul.f32 1.0, %v980
    %v982 = vrcp.pop %v764
    %v983 = vmul.f32 %v764, %v982
    %v984 = vsub.f32 1.0, %v983
    %v985 = vmul.f32 %v982, %v984
    %v986 = vadd.f32 %v982, %v985
    %vm987 = vweird.f32 %v764
    %vm988 = vweird.f32 %v982
    %vm989 = vmor %vm987, %vm988
    %v990 = vsel %vm989, %v982, %v986
    %v991 = vand.u32 2147483647, %v764
    %vm992 = vcmp.eq.f32.partialorder %v991, 8.507059e+37
    %v993 = vand.u32 %v764, 2147483648
    %v994 = vor.u32 1.1754944e-38, %v993
    %v995 = vsel %vm992, %v994, %v990
    %v996 = vmul.f32 1.0, %v995
    %v997 = vrcp.pop %v765
    %v998 = vmul.f32 %v765, %v997
    %v999 = vsub.f32 1.0, %v998
    %v1000 = vmul.f32 %v997, %v999
    %v1001 = vadd.f32 %v997, %v1000
    %vm1002 = vweird.f32 %v765
    %vm1003 = vweird.f32 %v997
    %vm1004 = vmor %vm1002, %vm1003
    %v1005 = vsel %vm1004, %v997, %v1001
    %v1006 = vand.u32 2147483647, %v765
    %vm1007 = vcmp.eq.f32.partialorder %v1006, 8.507059e+37
    %v1008 = vand.u32 %v765, 2147483648
    %v1009 = vor.u32 1.1754944e-38, %v1008
    %v1010 = vsel %vm1007, %v1009, %v1005
    %v1011 = vmul.f32 1.0, %v1010
    %v1012 = vrcp.pop %v766
    %v1013 = vmul.f32 %v766, %v1012
    %v1014 = vsub.f32 1.0, %v1013
    %v1015 = vmul.f32 %v1012, %v1014
    %v1016 = vadd.f32 %v1012, %v1015
    %vm1017 = vweird.f32 %v766
    %vm1018 = vweird.f32 %v1012
    %vm1019 = vmor %vm1017, %vm1018
    %v1020 = vsel %vm1019, %v1012, %v1016
    %v1021 = vand.u32 2147483647, %v766
    %vm1022 = vcmp.eq.f32.partialorder %v1021, 8.507059e+37
    %v1023 = vand.u32 %v766, 2147483648
    %v1024 = vor.u32 1.1754944e-38, %v1023
    %v1025 = vsel %vm1022, %v1024, %v1020
    %v1026 = vmul.f32 1.0, %v1025
    %v1027 = vrcp.pop %v767
    %v1028 = vmul.f32 %v767, %v1027
    %v1029 = vsub.f32 1.0, %v1028
    %v1030 = vmul.f32 %v1027, %v1029
    %v1031 = vadd.f32 %v1027, %v1030
    %vm1032 = vweird.f32 %v767
    %vm1033 = vweird.f32 %v1027
    %vm1034 = vmor %vm1032, %vm1033
    %v1035 = vsel %vm1034, %v1027, %v1031
    %v1036 = vand.u32 2147483647, %v767
    %vm1037 = vcmp.eq.f32.partialorder %v1036, 8.507059e+37
    %v1038 = vand.u32 %v767, 2147483648
    %v1039 = vor.u32 1.1754944e-38, %v1038
    %v1040 = vsel %vm1037, %v1039, %v1035
    %v1041 = vmul.f32 1.0, %v1040
    %v1042 = vrcp.pop %v768
    %v1043 = vmul.f32 %v768, %v1042
    %v1044 = vsub.f32 1.0, %v1043
    %v1045 = vmul.f32 %v1042, %v1044
    %v1046 = vadd.f32 %v1042, %v1045
    %vm1047 = vweird.f32 %v768
    %vm1048 = vweird.f32 %v1042
    %vm1049 = vmor %vm1047, %vm1048
    %v1050 = vsel %vm1049, %v1042, %v1046
    %v1051 = vand.u32 2147483647, %v768
    %vm1052 = vcmp.eq.f32.partialorder %v1051, 8.507059e+37
    %v1053 = vand.u32 %v768, 2147483648
    %v1054 = vor.u32 1.1754944e-38, %v1053
    %v1055 = vsel %vm1052, %v1054, %v1050
    %v1056 = vmul.f32 1.0, %v1055
    %v1057 = vrcp.pop %v769
    %v1058 = vmul.f32 %v769, %v1057
    %v1059 = vsub.f32 1.0, %v1058
    %v1060 = vmul.f32 %v1057, %v1059
    %v1061 = vadd.f32 %v1057, %v1060
    %vm1062 = vweird.f32 %v769
    %vm1063 = vweird.f32 %v1057
    %vm1064 = vmor %vm1062, %vm1063
    %v1065 = vsel %vm1064, %v1057, %v1061
    %v1066 = vand.u32 2147483647, %v769
    %vm1067 = vcmp.eq.f32.partialorder %v1066, 8.507059e+37
    %v1068 = vand.u32 %v769, 2147483648
    %v1069 = vor.u32 1.1754944e-38, %v1068
    %v1070 = vsel %vm1067, %v1069, %v1065
    %v1071 = vmul.f32 1.0, %v1070
    %v1072 = vrcp.pop %v770
    %v1073 = vmul.f32 %v770, %v1072
    %v1074 = vsub.f32 1.0, %v1073
    %v1075 = vmul.f32 %v1072, %v1074
    %v1076 = vadd.f32 %v1072, %v1075
    %vm1077 = vweird.f32 %v770
    %vm1078 = vweird.f32 %v1072
    %vm1079 = vmor %vm1077, %vm1078
    %v1080 = vsel %vm1079, %v1072, %v1076
    %v1081 = vand.u32 2147483647, %v770
    %vm1082 = vcmp.eq.f32.partialorder %v1081, 8.507059e+37
    %v1083 = vand.u32 %v770, 2147483648
    %v1084 = vor.u32 1.1754944e-38, %v1083
    %v1085 = vsel %vm1082, %v1084, %v1080
    %v1086 = vmul.f32 1.0, %v1085
    %v1087 = vrcp.pop %v771
    %v1088 = vmul.f32 %v771, %v1087
    %v1089 = vsub.f32 1.0, %v1088
    %v1090 = vmul.f32 %v1087, %v1089
    %v1091 = vadd.f32 %v1087, %v1090
    %vm1092 = vweird.f32 %v771
    %vm1093 = vweird.f32 %v1087
    %vm1094 = vmor %vm1092, %vm1093
    %v1095 = vsel %vm1094, %v1087, %v1091
    %v1096 = vand.u32 2147483647, %v771
    %vm1097 = vcmp.eq.f32.partialorder %v1096, 8.507059e+37
    %v1098 = vand.u32 %v771, 2147483648
    %v1099 = vor.u32 1.1754944e-38, %v1098
    %v1100 = vsel %vm1097, %v1099, %v1095
    %v1101 = vmul.f32 1.0, %v1100
    %v1102 = vrcp.pop %v772
    %v1103 = vmul.f32 %v772, %v1102
    %v1104 = vsub.f32 1.0, %v1103
    %v1105 = vmul.f32 %v1102, %v1104
    %v1106 = vadd.f32 %v1102, %v1105
    %vm1107 = vweird.f32 %v772
    %vm1108 = vweird.f32 %v1102
    %vm1109 = vmor %vm1107, %vm1108
    %v1110 = vsel %vm1109, %v1102, %v1106
    %v1111 = vand.u32 2147483647, %v772
    %vm1112 = vcmp.eq.f32.partialorder %v1111, 8.507059e+37
    %v1113 = vand.u32 %v772, 2147483648
    %v1114 = vor.u32 1.1754944e-38, %v1113
    %v1115 = vsel %vm1112, %v1114, %v1110
    %v1116 = vmul.f32 1.0, %v1115
    %v1117 = vrcp.pop %v773
    %v1118 = vmul.f32 %v773, %v1117
    %v1119 = vsub.f32 1.0, %v1118
    %v1120 = vmul.f32 %v1117, %v1119
    %v1121 = vadd.f32 %v1117, %v1120
    %vm1122 = vweird.f32 %v773
    %vm1123 = vweird.f32 %v1117
    %vm1124 = vmor %vm1122, %vm1123
    %v1125 = vsel %vm1124, %v1117, %v1121
    %v1126 = vand.u32 2147483647, %v773
    %vm1127 = vcmp.eq.f32.partialorder %v1126, 8.507059e+37
    %v1128 = vand.u32 %v773, 2147483648
    %v1129 = vor.u32 1.1754944e-38, %v1128
    %v1130 = vsel %vm1127, %v1129, %v1125
    %v1131 = vmul.f32 1.0, %v1130
    %v1132 = vrcp.pop %v774
    %v1133 = vmul.f32 %v774, %v1132
    %v1134 = vsub.f32 1.0, %v1133
    %v1135 = vmul.f32 %v1132, %v1134
    %v1136 = vadd.f32 %v1132, %v1135
    %vm1137 = vweird.f32 %v774
    %vm1138 = vweird.f32 %v1132
    %vm1139 = vmor %vm1137, %vm1138
    %v1140 = vsel %vm1139, %v1132, %v1136
    %v1141 = vand.u32 2147483647, %v774
    %vm1142 = vcmp.eq.f32.partialorder %v1141, 8.507059e+37
    %v1143 = vand.u32 %v774, 2147483648
    %v1144 = vor.u32 1.1754944e-38, %v1143
    %v1145 = vsel %vm1142, %v1144, %v1140
    %v1146 = vmul.f32 1.0, %v1145
    %v1147 = vrcp.pop %v775
    %v1148 = vmul.f32 %v775, %v1147
    %v1149 = vsub.f32 1.0, %v1148
    %v1150 = vmul.f32 %v1147, %v1149
    %v1151 = vadd.f32 %v1147, %v1150
    %vm1152 = vweird.f32 %v775
    %vm1153 = vweird.f32 %v1147
    %vm1154 = vmor %vm1152, %vm1153
    %v1155 = vsel %vm1154, %v1147, %v1151
    %v1156 = vand.u32 2147483647, %v775
    %vm1157 = vcmp.eq.f32.partialorder %v1156, 8.507059e+37
    %v1158 = vand.u32 %v775, 2147483648
    %v1159 = vor.u32 1.1754944e-38, %v1158
    %v1160 = vsel %vm1157, %v1159, %v1155
    %v1161 = vmul.f32 1.0, %v1160
    %v1162 = vrcp.pop %v776
    %v1163 = vmul.f32 %v776, %v1162
    %v1164 = vsub.f32 1.0, %v1163
    %v1165 = vmul.f32 %v1162, %v1164
    %v1166 = vadd.f32 %v1162, %v1165
    %vm1167 = vweird.f32 %v776
    %vm1168 = vweird.f32 %v1162
    %vm1169 = vmor %vm1167, %vm1168
    %v1170 = vsel %vm1169, %v1162, %v1166
    %v1171 = vand.u32 2147483647, %v776
    %vm1172 = vcmp.eq.f32.partialorder %v1171, 8.507059e+37
    %v1173 = vand.u32 %v776, 2147483648
    %v1174 = vor.u32 1.1754944e-38, %v1173
    %v1175 = vsel %vm1172, %v1174, %v1170
    %v1176 = vmul.f32 1.0, %v1175
    %v1177 = vrcp.pop %v777
    %v1178 = vmul.f32 %v777, %v1177
    %v1179 = vsub.f32 1.0, %v1178
    %v1180 = vmul.f32 %v1177, %v1179
    %v1181 = vadd.f32 %v1177, %v1180
    %vm1182 = vweird.f32 %v777
    %vm1183 = vweird.f32 %v1177
    %vm1184 = vmor %vm1182, %vm1183
    %v1185 = vsel %vm1184, %v1177, %v1181
    %v1186 = vand.u32 2147483647, %v777
    %vm1187 = vcmp.eq.f32.partialorder %v1186, 8.507059e+37
    %v1188 = vand.u32 %v777, 2147483648
    %v1189 = vor.u32 1.1754944e-38, %v1188
    %v1190 = vsel %vm1187, %v1189, %v1185
    %v1191 = vmul.f32 1.0, %v1190
    %v1192 = vrcp.pop %v778
    %v1193 = vmul.f32 %v778, %v1192
    %v1194 = vsub.f32 1.0, %v1193
    %v1195 = vmul.f32 %v1192, %v1194
    %v1196 = vadd.f32 %v1192, %v1195
    %vm1197 = vweird.f32 %v778
    %vm1198 = vweird.f32 %v1192
    %vm1199 = vmor %vm1197, %vm1198
    %v1200 = vsel %vm1199, %v1192, %v1196
    %v1201 = vand.u32 2147483647, %v778
    %vm1202 = vcmp.eq.f32.partialorder %v1201, 8.507059e+37
    %v1203 = vand.u32 %v778, 2147483648
    %v1204 = vor.u32 1.1754944e-38, %v1203
    %v1205 = vsel %vm1202, %v1204, %v1200
    %v1206 = vmul.f32 1.0, %v1205
    %v1207 = vrcp.pop %v779
    %v1208 = vmul.f32 %v779, %v1207
    %v1209 = vsub.f32 1.0, %v1208
    %v1210 = vmul.f32 %v1207, %v1209
    %v1211 = vadd.f32 %v1207, %v1210
    %vm1212 = vweird.f32 %v779
    %vm1213 = vweird.f32 %v1207
    %vm1214 = vmor %vm1212, %vm1213
    %v1215 = vsel %vm1214, %v1207, %v1211
    %v1216 = vand.u32 2147483647, %v779
    %vm1217 = vcmp.eq.f32.partialorder %v1216, 8.507059e+37
    %v1218 = vand.u32 %v779, 2147483648
    %v1219 = vor.u32 1.1754944e-38, %v1218
    %v1220 = vsel %vm1217, %v1219, %v1215
    %v1221 = vmul.f32 1.0, %v1220
    %v1222 = vrcp.pop %v780
    %v1223 = vmul.f32 %v780, %v1222
    %v1224 = vsub.f32 1.0, %v1223
    %v1225 = vmul.f32 %v1222, %v1224
    %v1226 = vadd.f32 %v1222, %v1225
    %vm1227 = vweird.f32 %v780
    %vm1228 = vweird.f32 %v1222
    %vm1229 = vmor %vm1227, %vm1228
    %v1230 = vsel %vm1229, %v1222, %v1226
    %v1231 = vand.u32 2147483647, %v780
    %vm1232 = vcmp.eq.f32.partialorder %v1231, 8.507059e+37
    %v1233 = vand.u32 %v780, 2147483648
    %v1234 = vor.u32 1.1754944e-38, %v1233
    %v1235 = vsel %vm1232, %v1234, %v1230
    %v1236 = vmul.f32 1.0, %v1235
    %v1237 = vrcp.pop %v781
    %v1238 = vmul.f32 %v781, %v1237
    %v1239 = vsub.f32 1.0, %v1238
    %v1240 = vmul.f32 %v1237, %v1239
    %v1241 = vadd.f32 %v1237, %v1240
    %vm1242 = vweird.f32 %v781
    %vm1243 = vweird.f32 %v1237
    %vm1244 = vmor %vm1242, %vm1243
    %v1245 = vsel %vm1244, %v1237, %v1241
    %v1246 = vand.u32 2147483647, %v781
    %vm1247 = vcmp.eq.f32.partialorder %v1246, 8.507059e+37
    %v1248 = vand.u32 %v781, 2147483648
    %v1249 = vor.u32 1.1754944e-38, %v1248
    %v1250 = vsel %vm1247, %v1249, %v1245
    %v1251 = vmul.f32 1.0, %v1250
    %v1252 = vrcp.pop %v782
    %v1253 = vmul.f32 %v782, %v1252
    %v1254 = vsub.f32 1.0, %v1253
    %v1255 = vmul.f32 %v1252, %v1254
    %v1256 = vadd.f32 %v1252, %v1255
    %vm1257 = vweird.f32 %v782
    %vm1258 = vweird.f32 %v1252
    %vm1259 = vmor %vm1257, %vm1258
    %v1260 = vsel %vm1259, %v1252, %v1256
    %v1261 = vand.u32 2147483647, %v782
    %vm1262 = vcmp.eq.f32.partialorder %v1261, 8.507059e+37
    %v1263 = vand.u32 %v782, 2147483648
    %v1264 = vor.u32 1.1754944e-38, %v1263
    %v1265 = vsel %vm1262, %v1264, %v1260
    %v1266 = vmul.f32 1.0, %v1265
    %v1267 = vrcp.pop %v783
    %v1268 = vmul.f32 %v783, %v1267
    %v1269 = vsub.f32 1.0, %v1268
    %v1270 = vmul.f32 %v1267, %v1269
    %v1271 = vadd.f32 %v1267, %v1270
    %vm1272 = vweird.f32 %v783
    %vm1273 = vweird.f32 %v1267
    %vm1274 = vmor %vm1272, %vm1273
    %v1275 = vsel %vm1274, %v1267, %v1271
    %v1276 = vand.u32 2147483647, %v783
    %vm1277 = vcmp.eq.f32.partialorder %v1276, 8.507059e+37
    %v1278 = vand.u32 %v783, 2147483648
    %v1279 = vor.u32 1.1754944e-38, %v1278
    %v1280 = vsel %vm1277, %v1279, %v1275
    %v1281 = vmul.f32 1.0, %v1280
    %v1282 = vrcp.pop %v784
    %v1283 = vmul.f32 %v784, %v1282
    %v1284 = vsub.f32 1.0, %v1283
    %v1285 = vmul.f32 %v1282, %v1284
    %v1286 = vadd.f32 %v1282, %v1285
    %vm1287 = vweird.f32 %v784
    %vm1288 = vweird.f32 %v1282
    %vm1289 = vmor %vm1287, %vm1288
    %v1290 = vsel %vm1289, %v1282, %v1286
    %v1291 = vand.u32 2147483647, %v784
    %vm1292 = vcmp.eq.f32.partialorder %v1291, 8.507059e+37
    %v1293 = vand.u32 %v784, 2147483648
    %v1294 = vor.u32 1.1754944e-38, %v1293
    %v1295 = vsel %vm1292, %v1294, %v1290
    %v1296 = vmul.f32 1.0, %v1295
    %v1297 = vrcp.pop %v785
    %v1298 = vmul.f32 %v785, %v1297
    %v1299 = vsub.f32 1.0, %v1298
    %v1300 = vmul.f32 %v1297, %v1299
    %v1301 = vadd.f32 %v1297, %v1300
    %vm1302 = vweird.f32 %v785
    %vm1303 = vweird.f32 %v1297
    %vm1304 = vmor %vm1302, %vm1303
    %v1305 = vsel %vm1304, %v1297, %v1301
    %v1306 = vand.u32 2147483647, %v785
    %vm1307 = vcmp.eq.f32.partialorder %v1306, 8.507059e+37
    %v1308 = vand.u32 %v785, 2147483648
    %v1309 = vor.u32 1.1754944e-38, %v1308
    %v1310 = vsel %vm1307, %v1309, %v1305
    %v1311 = vmul.f32 1.0, %v1310
    %v1312 = vrcp.pop %v786
    %v1313 = vmul.f32 %v786, %v1312
    %v1314 = vsub.f32 1.0, %v1313
    %v1315 = vmul.f32 %v1312, %v1314
    %v1316 = vadd.f32 %v1312, %v1315
    %vm1317 = vweird.f32 %v786
    %vm1318 = vweird.f32 %v1312
    %vm1319 = vmor %vm1317, %vm1318
    %v1320 = vsel %vm1319, %v1312, %v1316
    %v1321 = vand.u32 2147483647, %v786
    %vm1322 = vcmp.eq.f32.partialorder %v1321, 8.507059e+37
    %v1323 = vand.u32 %v786, 2147483648
    %v1324 = vor.u32 1.1754944e-38, %v1323
    %v1325 = vsel %vm1322, %v1324, %v1320
    %v1326 = vmul.f32 1.0, %v1325
    %v1327 = vrcp.pop %v787
    %v1328 = vmul.f32 %v787, %v1327
    %v1329 = vsub.f32 1.0, %v1328
    %v1330 = vmul.f32 %v1327, %v1329
    %v1331 = vadd.f32 %v1327, %v1330
    %vm1332 = vweird.f32 %v787
    %vm1333 = vweird.f32 %v1327
    %vm1334 = vmor %vm1332, %vm1333
    %v1335 = vsel %vm1334, %v1327, %v1331
    %v1336 = vand.u32 2147483647, %v787
    %vm1337 = vcmp.eq.f32.partialorder %v1336, 8.507059e+37
    %v1338 = vand.u32 %v787, 2147483648
    %v1339 = vor.u32 1.1754944e-38, %v1338
    %v1340 = vsel %vm1337, %v1339, %v1335
    %v1341 = vmul.f32 1.0, %v1340
    %v1342 = vrcp.pop %v788
    %v1343 = vmul.f32 %v788, %v1342
    %v1344 = vsub.f32 1.0, %v1343
    %v1345 = vmul.f32 %v1342, %v1344
    %v1346 = vadd.f32 %v1342, %v1345
    %vm1347 = vweird.f32 %v788
    %vm1348 = vweird.f32 %v1342
    %vm1349 = vmor %vm1347, %vm1348
    %v1350 = vsel %vm1349, %v1342, %v1346
    %v1351 = vand.u32 2147483647, %v788
    %vm1352 = vcmp.eq.f32.partialorder %v1351, 8.507059e+37
    %v1353 = vand.u32 %v788, 2147483648
    %v1354 = vor.u32 1.1754944e-38, %v1353
    %v1355 = vsel %vm1352, %v1354, %v1350
    %v1356 = vmul.f32 1.0, %v1355
    %v1357 = vrcp.pop %v789
    %v1358 = vmul.f32 %v789, %v1357
    %v1359 = vsub.f32 1.0, %v1358
    %v1360 = vmul.f32 %v1357, %v1359
    %v1361 = vadd.f32 %v1357, %v1360
    %vm1362 = vweird.f32 %v789
    %vm1363 = vweird.f32 %v1357
    %vm1364 = vmor %vm1362, %vm1363
    %v1365 = vsel %vm1364, %v1357, %v1361
    %v1366 = vand.u32 2147483647, %v789
    %vm1367 = vcmp.eq.f32.partialorder %v1366, 8.507059e+37
    %v1368 = vand.u32 %v789, 2147483648
    %v1369 = vor.u32 1.1754944e-38, %v1368
    %v1370 = vsel %vm1367, %v1369, %v1365
    %v1371 = vmul.f32 1.0, %v1370
    %v1372 = vrcp.pop %v790
    %v1373 = vmul.f32 %v790, %v1372
    %v1374 = vsub.f32 1.0, %v1373
    %v1375 = vmul.f32 %v1372, %v1374
    %v1376 = vadd.f32 %v1372, %v1375
    %vm1377 = vweird.f32 %v790
    %vm1378 = vweird.f32 %v1372
    %vm1379 = vmor %vm1377, %vm1378
    %v1380 = vsel %vm1379, %v1372, %v1376
    %v1381 = vand.u32 2147483647, %v790
    %vm1382 = vcmp.eq.f32.partialorder %v1381, 8.507059e+37
    %v1383 = vand.u32 %v790, 2147483648
    %v1384 = vor.u32 1.1754944e-38, %v1383
    %v1385 = vsel %vm1382, %v1384, %v1380
    %v1386 = vmul.f32 1.0, %v1385
    %v1387 = vrcp.pop %v791
    %v1388 = vmul.f32 %v791, %v1387
    %v1389 = vsub.f32 1.0, %v1388
    %v1390 = vmul.f32 %v1387, %v1389
    %v1391 = vadd.f32 %v1387, %v1390
    %vm1392 = vweird.f32 %v791
    %vm1393 = vweird.f32 %v1387
    %vm1394 = vmor %vm1392, %vm1393
    %v1395 = vsel %vm1394, %v1387, %v1391
    %v1396 = vand.u32 2147483647, %v791
    %vm1397 = vcmp.eq.f32.partialorder %v1396, 8.507059e+37
    %v1398 = vand.u32 %v791, 2147483648
    %v1399 = vor.u32 1.1754944e-38, %v1398
    %v1400 = vsel %vm1397, %v1399, %v1395
    %v1401 = vmul.f32 1.0, %v1400
    %v1402 = vrcp.pop %v792
    %v1403 = vmul.f32 %v792, %v1402
    %v1404 = vsub.f32 1.0, %v1403
    %v1405 = vmul.f32 %v1402, %v1404
    %v1406 = vadd.f32 %v1402, %v1405
    %vm1407 = vweird.f32 %v792
    %vm1408 = vweird.f32 %v1402
    %vm1409 = vmor %vm1407, %vm1408
    %v1410 = vsel %vm1409, %v1402, %v1406
    %v1411 = vand.u32 2147483647, %v792
    %vm1412 = vcmp.eq.f32.partialorder %v1411, 8.507059e+37
    %v1413 = vand.u32 %v792, 2147483648
    %v1414 = vor.u32 1.1754944e-38, %v1413
    %v1415 = vsel %vm1412, %v1414, %v1410
    %v1416 = vmul.f32 1.0, %v1415
    %v1417 = vrcp.pop %v793
    %v1418 = vmul.f32 %v793, %v1417
    %v1419 = vsub.f32 1.0, %v1418
    %v1420 = vmul.f32 %v1417, %v1419
    %v1421 = vadd.f32 %v1417, %v1420
    %vm1422 = vweird.f32 %v793
    %vm1423 = vweird.f32 %v1417
    %vm1424 = vmor %vm1422, %vm1423
    %v1425 = vsel %vm1424, %v1417, %v1421
    %v1426 = vand.u32 2147483647, %v793
    %vm1427 = vcmp.eq.f32.partialorder %v1426, 8.507059e+37
    %v1428 = vand.u32 %v793, 2147483648
    %v1429 = vor.u32 1.1754944e-38, %v1428
    %v1430 = vsel %vm1427, %v1429, %v1425
    %v1431 = vmul.f32 1.0, %v1430
    %v1432 = vrcp.pop %v794
    %v1433 = vmul.f32 %v794, %v1432
    %v1434 = vsub.f32 1.0, %v1433
    %v1435 = vmul.f32 %v1432, %v1434
    %v1436 = vadd.f32 %v1432, %v1435
    %vm1437 = vweird.f32 %v794
    %vm1438 = vweird.f32 %v1432
    %vm1439 = vmor %vm1437, %vm1438
    %v1440 = vsel %vm1439, %v1432, %v1436
    %v1441 = vand.u32 2147483647, %v794
    %vm1442 = vcmp.eq.f32.partialorder %v1441, 8.507059e+37
    %v1443 = vand.u32 %v794, 2147483648
    %v1444 = vor.u32 1.1754944e-38, %v1443
    %v1445 = vsel %vm1442, %v1444, %v1440
    %v1446 = vmul.f32 1.0, %v1445
    %v1447 = vrcp.pop %v795
    %v1448 = vmul.f32 %v795, %v1447
    %v1449 = vsub.f32 1.0, %v1448
    %v1450 = vmul.f32 %v1447, %v1449
    %v1451 = vadd.f32 %v1447, %v1450
    %vm1452 = vweird.f32 %v795
    %vm1453 = vweird.f32 %v1447
    %vm1454 = vmor %vm1452, %vm1453
    %v1455 = vsel %vm1454, %v1447, %v1451
    %v1456 = vand.u32 2147483647, %v795
    %vm1457 = vcmp.eq.f32.partialorder %v1456, 8.507059e+37
    %v1458 = vand.u32 %v795, 2147483648
    %v1459 = vor.u32 1.1754944e-38, %v1458
    %v1460 = vsel %vm1457, %v1459, %v1455
    %v1461 = vmul.f32 1.0, %v1460
    %v1462 = vrcp.pop %v796
    %v1463 = vmul.f32 %v796, %v1462
    %v1464 = vsub.f32 1.0, %v1463
    %v1465 = vmul.f32 %v1462, %v1464
    %v1466 = vadd.f32 %v1462, %v1465
    %vm1467 = vweird.f32 %v796
    %vm1468 = vweird.f32 %v1462
    %vm1469 = vmor %vm1467, %vm1468
    %v1470 = vsel %vm1469, %v1462, %v1466
    %v1471 = vand.u32 2147483647, %v796
    %vm1472 = vcmp.eq.f32.partialorder %v1471, 8.507059e+37
    %v1473 = vand.u32 %v796, 2147483648
    %v1474 = vor.u32 1.1754944e-38, %v1473
    %v1475 = vsel %vm1472, %v1474, %v1470
    %v1476 = vmul.f32 1.0, %v1475
    %v1477 = vrcp.pop %v797
    %v1478 = vmul.f32 %v797, %v1477
    %v1479 = vsub.f32 1.0, %v1478
    %v1480 = vmul.f32 %v1477, %v1479
    %v1481 = vadd.f32 %v1477, %v1480
    %vm1482 = vweird.f32 %v797
    %vm1483 = vweird.f32 %v1477
    %vm1484 = vmor %vm1482, %vm1483
    %v1485 = vsel %vm1484, %v1477, %v1481
    %v1486 = vand.u32 2147483647, %v797
    %vm1487 = vcmp.eq.f32.partialorder %v1486, 8.507059e+37
    %v1488 = vand.u32 %v797, 2147483648
    %v1489 = vor.u32 1.1754944e-38, %v1488
    %v1490 = vsel %vm1487, %v1489, %v1485
    %v1491 = vmul.f32 1.0, %v1490
    %v1492 = vrcp.pop %v798
    %v1493 = vmul.f32 %v798, %v1492
    %v1494 = vsub.f32 1.0, %v1493
    %v1495 = vmul.f32 %v1492, %v1494
    %v1496 = vadd.f32 %v1492, %v1495
    %vm1497 = vweird.f32 %v798
    %vm1498 = vweird.f32 %v1492
    %vm1499 = vmor %vm1497, %vm1498
    %v1500 = vsel %vm1499, %v1492, %v1496
    %v1501 = vand.u32 2147483647, %v798
    %vm1502 = vcmp.eq.f32.partialorder %v1501, 8.507059e+37
    %v1503 = vand.u32 %v798, 2147483648
    %v1504 = vor.u32 1.1754944e-38, %v1503
    %v1505 = vsel %vm1502, %v1504, %v1500
    %v1506 = vmul.f32 1.0, %v1505
    %v1507 = vrcp.pop %v799
    %v1508 = vmul.f32 %v799, %v1507
    %v1509 = vsub.f32 1.0, %v1508
    %v1510 = vmul.f32 %v1507, %v1509
    %v1511 = vadd.f32 %v1507, %v1510
    %vm1512 = vweird.f32 %v799
    %vm1513 = vweird.f32 %v1507
    %vm1514 = vmor %vm1512, %vm1513
    %v1515 = vsel %vm1514, %v1507, %v1511
    %v1516 = vand.u32 2147483647, %v799
    %vm1517 = vcmp.eq.f32.partialorder %v1516, 8.507059e+37
    %v1518 = vand.u32 %v799, 2147483648
    %v1519 = vor.u32 1.1754944e-38, %v1518
    %v1520 = vsel %vm1517, %v1519, %v1515
    %v1521 = vmul.f32 1.0, %v1520
    %v1522 = vrcp.pop %v800
    %v1523 = vmul.f32 %v800, %v1522
    %v1524 = vsub.f32 1.0, %v1523
    %v1525 = vmul.f32 %v1522, %v1524
    %v1526 = vadd.f32 %v1522, %v1525
    %vm1527 = vweird.f32 %v800
    %vm1528 = vweird.f32 %v1522
    %vm1529 = vmor %vm1527, %vm1528
    %v1530 = vsel %vm1529, %v1522, %v1526
    %v1531 = vand.u32 2147483647, %v800
    %vm1532 = vcmp.eq.f32.partialorder %v1531, 8.507059e+37
    %v1533 = vand.u32 %v800, 2147483648
    %v1534 = vor.u32 1.1754944e-38, %v1533
    %v1535 = vsel %vm1532, %v1534, %v1530
    %v1536 = vmul.f32 1.0, %v1535
    %v1537 = vrcp.pop %v801
    %v1538 = vmul.f32 %v801, %v1537
    %v1539 = vsub.f32 1.0, %v1538
    %v1540 = vmul.f32 %v1537, %v1539
    %v1541 = vadd.f32 %v1537, %v1540
    %vm1542 = vweird.f32 %v801
    %vm1543 = vweird.f32 %v1537
    %vm1544 = vmor %vm1542, %vm1543
    %v1545 = vsel %vm1544, %v1537, %v1541
    %v1546 = vand.u32 2147483647, %v801
    %vm1547 = vcmp.eq.f32.partialorder %v1546, 8.507059e+37
    %v1548 = vand.u32 %v801, 2147483648
    %v1549 = vor.u32 1.1754944e-38, %v1548
    %v1550 = vsel %vm1547, %v1549, %v1545
    %v1551 = vmul.f32 1.0, %v1550
    %v1552 = vrcp.pop %v802
    %v1553 = vmul.f32 %v802, %v1552
    %v1554 = vsub.f32 1.0, %v1553
    %v1555 = vmul.f32 %v1552, %v1554
    %v1556 = vadd.f32 %v1552, %v1555
    %vm1557 = vweird.f32 %v802
    %vm1558 = vweird.f32 %v1552
    %vm1559 = vmor %vm1557, %vm1558
    %v1560 = vsel %vm1559, %v1552, %v1556
    %v1561 = vand.u32 2147483647, %v802
    %vm1562 = vcmp.eq.f32.partialorder %v1561, 8.507059e+37
    %v1563 = vand.u32 %v802, 2147483648
    %v1564 = vor.u32 1.1754944e-38, %v1563
    %v1565 = vsel %vm1562, %v1564, %v1560
    %v1566 = vmul.f32 1.0, %v1565
    %v1567 = vrcp.pop %v803
    %v1568 = vmul.f32 %v803, %v1567
    %v1569 = vsub.f32 1.0, %v1568
    %v1570 = vmul.f32 %v1567, %v1569
    %v1571 = vadd.f32 %v1567, %v1570
    %vm1572 = vweird.f32 %v803
    %vm1573 = vweird.f32 %v1567
    %vm1574 = vmor %vm1572, %vm1573
    %v1575 = vsel %vm1574, %v1567, %v1571
    %v1576 = vand.u32 2147483647, %v803
    %vm1577 = vcmp.eq.f32.partialorder %v1576, 8.507059e+37
    %v1578 = vand.u32 %v803, 2147483648
    %v1579 = vor.u32 1.1754944e-38, %v1578
    %v1580 = vsel %vm1577, %v1579, %v1575
    %v1581 = vmul.f32 1.0, %v1580
    %v1582 = vrcp.pop %v804
    %v1583 = vmul.f32 %v804, %v1582
    %v1584 = vsub.f32 1.0, %v1583
    %v1585 = vmul.f32 %v1582, %v1584
    %v1586 = vadd.f32 %v1582, %v1585
    %vm1587 = vweird.f32 %v804
    %vm1588 = vweird.f32 %v1582
    %vm1589 = vmor %vm1587, %vm1588
    %v1590 = vsel %vm1589, %v1582, %v1586
    %v1591 = vand.u32 2147483647, %v804
    %vm1592 = vcmp.eq.f32.partialorder %v1591, 8.507059e+37
    %v1593 = vand.u32 %v804, 2147483648
    %v1594 = vor.u32 1.1754944e-38, %v1593
    %v1595 = vsel %vm1592, %v1594, %v1590
    %v1596 = vmul.f32 1.0, %v1595
    %v1597 = vrcp.pop %v805
    %v1598 = vmul.f32 %v805, %v1597
    %v1599 = vsub.f32 1.0, %v1598
    %v1600 = vmul.f32 %v1597, %v1599
    %v1601 = vadd.f32 %v1597, %v1600
    %vm1602 = vweird.f32 %v805
    %vm1603 = vweird.f32 %v1597
    %vm1604 = vmor %vm1602, %vm1603
    %v1605 = vsel %vm1604, %v1597, %v1601
    %v1606 = vand.u32 2147483647, %v805
    %vm1607 = vcmp.eq.f32.partialorder %v1606, 8.507059e+37
    %v1608 = vand.u32 %v805, 2147483648
    %v1609 = vor.u32 1.1754944e-38, %v1608
    %v1610 = vsel %vm1607, %v1609, %v1605
    %v1611 = vmul.f32 1.0, %v1610
    %v1612 = vrcp.pop %v806
    %v1613 = vmul.f32 %v806, %v1612
    %v1614 = vsub.f32 1.0, %v1613
    %v1615 = vmul.f32 %v1612, %v1614
    %v1616 = vadd.f32 %v1612, %v1615
    %vm1617 = vweird.f32 %v806
    %vm1618 = vweird.f32 %v1612
    %vm1619 = vmor %vm1617, %vm1618
    %v1620 = vsel %vm1619, %v1612, %v1616
    %v1621 = vand.u32 2147483647, %v806
    %vm1622 = vcmp.eq.f32.partialorder %v1621, 8.507059e+37
    %v1623 = vand.u32 %v806, 2147483648
    %v1624 = vor.u32 1.1754944e-38, %v1623
    %v1625 = vsel %vm1622, %v1624, %v1620
    %v1626 = vmul.f32 1.0, %v1625
    %v1627 = vrcp.pop %v807
    %v1628 = vmul.f32 %v807, %v1627
    %v1629 = vsub.f32 1.0, %v1628
    %v1630 = vmul.f32 %v1627, %v1629
    %v1631 = vadd.f32 %v1627, %v1630
    %vm1632 = vweird.f32 %v807
    %vm1633 = vweird.f32 %v1627
    %vm1634 = vmor %vm1632, %vm1633
    %v1635 = vsel %vm1634, %v1627, %v1631
    %v1636 = vand.u32 2147483647, %v807
    %vm1637 = vcmp.eq.f32.partialorder %v1636, 8.507059e+37
    %v1638 = vand.u32 %v807, 2147483648
    %v1639 = vor.u32 1.1754944e-38, %v1638
    %v1640 = vsel %vm1637, %v1639, %v1635
    %v1641 = vmul.f32 1.0, %v1640
    %v1642 = vrcp.pop %v808
    %v1643 = vmul.f32 %v808, %v1642
    %v1644 = vsub.f32 1.0, %v1643
    %v1645 = vmul.f32 %v1642, %v1644
    %v1646 = vadd.f32 %v1642, %v1645
    %vm1647 = vweird.f32 %v808
    %vm1648 = vweird.f32 %v1642
    %vm1649 = vmor %vm1647, %vm1648
    %v1650 = vsel %vm1649, %v1642, %v1646
    %v1651 = vand.u32 2147483647, %v808
    %vm1652 = vcmp.eq.f32.partialorder %v1651, 8.507059e+37
    %v1653 = vand.u32 %v808, 2147483648
    %v1654 = vor.u32 1.1754944e-38, %v1653
    %v1655 = vsel %vm1652, %v1654, %v1650
    %v1656 = vmul.f32 1.0, %v1655
    %v1657 = vrcp.pop %v809
    %v1658 = vmul.f32 %v809, %v1657
    %v1659 = vsub.f32 1.0, %v1658
    %v1660 = vmul.f32 %v1657, %v1659
    %v1661 = vadd.f32 %v1657, %v1660
    %vm1662 = vweird.f32 %v809
    %vm1663 = vweird.f32 %v1657
    %vm1664 = vmor %vm1662, %vm1663
    %v1665 = vsel %vm1664, %v1657, %v1661
    %v1666 = vand.u32 2147483647, %v809
    %vm1667 = vcmp.eq.f32.partialorder %v1666, 8.507059e+37
    %v1668 = vand.u32 %v809, 2147483648
    %v1669 = vor.u32 1.1754944e-38, %v1668
    %v1670 = vsel %vm1667, %v1669, %v1665
    %v1671 = vmul.f32 1.0, %v1670
    %v1672 = vrcp.pop %v810
    %v1673 = vmul.f32 %v810, %v1672
    %v1674 = vsub.f32 1.0, %v1673
    %v1675 = vmul.f32 %v1672, %v1674
    %v1676 = vadd.f32 %v1672, %v1675
    %vm1677 = vweird.f32 %v810
    %vm1678 = vweird.f32 %v1672
    %vm1679 = vmor %vm1677, %vm1678
    %v1680 = vsel %vm1679, %v1672, %v1676
    %v1681 = vand.u32 2147483647, %v810
    %vm1682 = vcmp.eq.f32.partialorder %v1681, 8.507059e+37
    %v1683 = vand.u32 %v810, 2147483648
    %v1684 = vor.u32 1.1754944e-38, %v1683
    %v1685 = vsel %vm1682, %v1684, %v1680
    %v1686 = vmul.f32 1.0, %v1685
    %v1687 = vrcp.pop %v811
    %v1688 = vmul.f32 %v811, %v1687
    %v1689 = vsub.f32 1.0, %v1688
    %v1690 = vmul.f32 %v1687, %v1689
    %v1691 = vadd.f32 %v1687, %v1690
    %vm1692 = vweird.f32 %v811
    %vm1693 = vweird.f32 %v1687
    %vm1694 = vmor %vm1692, %vm1693
    %v1695 = vsel %vm1694, %v1687, %v1691
    %v1696 = vand.u32 2147483647, %v811
    %vm1697 = vcmp.eq.f32.partialorder %v1696, 8.507059e+37
    %v1698 = vand.u32 %v811, 2147483648
    %v1699 = vor.u32 1.1754944e-38, %v1698
    %v1700 = vsel %vm1697, %v1699, %v1695
    %v1701 = vmul.f32 1.0, %v1700
    %v1702 = vrcp.pop %v812
    %v1703 = vmul.f32 %v812, %v1702
    %v1704 = vsub.f32 1.0, %v1703
    %v1705 = vmul.f32 %v1702, %v1704
    %v1706 = vadd.f32 %v1702, %v1705
    %vm1707 = vweird.f32 %v812
    %vm1708 = vweird.f32 %v1702
    %vm1709 = vmor %vm1707, %vm1708
    %v1710 = vsel %vm1709, %v1702, %v1706
    %v1711 = vand.u32 2147483647, %v812
    %vm1712 = vcmp.eq.f32.partialorder %v1711, 8.507059e+37
    %v1713 = vand.u32 %v812, 2147483648
    %v1714 = vor.u32 1.1754944e-38, %v1713
    %v1715 = vsel %vm1712, %v1714, %v1710
    %v1716 = vmul.f32 1.0, %v1715
    %v1717 = vrcp.pop %v813
    %v1718 = vmul.f32 %v813, %v1717
    %v1719 = vsub.f32 1.0, %v1718
    %v1720 = vmul.f32 %v1717, %v1719
    %v1721 = vadd.f32 %v1717, %v1720
    %vm1722 = vweird.f32 %v813
    %vm1723 = vweird.f32 %v1717
    %vm1724 = vmor %vm1722, %vm1723
    %v1725 = vsel %vm1724, %v1717, %v1721
    %v1726 = vand.u32 2147483647, %v813
    %vm1727 = vcmp.eq.f32.partialorder %v1726, 8.507059e+37
    %v1728 = vand.u32 %v813, 2147483648
    %v1729 = vor.u32 1.1754944e-38, %v1728
    %v1730 = vsel %vm1727, %v1729, %v1725
    %v1731 = vmul.f32 1.0, %v1730
    %v1732 = vrcp.pop %v814
    %v1733 = vmul.f32 %v814, %v1732
    %v1734 = vsub.f32 1.0, %v1733
    %v1735 = vmul.f32 %v1732, %v1734
    %v1736 = vadd.f32 %v1732, %v1735
    %vm1737 = vweird.f32 %v814
    %vm1738 = vweird.f32 %v1732
    %vm1739 = vmor %vm1737, %vm1738
    %v1740 = vsel %vm1739, %v1732, %v1736
    %v1741 = vand.u32 2147483647, %v814
    %vm1742 = vcmp.eq.f32.partialorder %v1741, 8.507059e+37
    %v1743 = vand.u32 %v814, 2147483648
    %v1744 = vor.u32 1.1754944e-38, %v1743
    %v1745 = vsel %vm1742, %v1744, %v1740
    %v1746 = vmul.f32 1.0, %v1745
    %v1747 = vrcp.pop %v815
    %v1748 = vmul.f32 %v815, %v1747
    %v1749 = vsub.f32 1.0, %v1748
    %v1750 = vmul.f32 %v1747, %v1749
    %v1751 = vadd.f32 %v1747, %v1750
    %vm1752 = vweird.f32 %v815
    %vm1753 = vweird.f32 %v1747
    %vm1754 = vmor %vm1752, %vm1753
    %v1755 = vsel %vm1754, %v1747, %v1751
    %v1756 = vand.u32 2147483647, %v815
    %vm1757 = vcmp.eq.f32.partialorder %v1756, 8.507059e+37
    %v1758 = vand.u32 %v815, 2147483648
    %v1759 = vor.u32 1.1754944e-38, %v1758
    %v1760 = vsel %vm1757, %v1759, %v1755
    %v1761 = vmul.f32 1.0, %v1760
    %v1762 = vrcp.pop %v816
    %v1763 = vmul.f32 %v816, %v1762
    %v1764 = vsub.f32 1.0, %v1763
    %v1765 = vmul.f32 %v1762, %v1764
    %v1766 = vadd.f32 %v1762, %v1765
    %vm1767 = vweird.f32 %v816
    %vm1768 = vweird.f32 %v1762
    %vm1769 = vmor %vm1767, %vm1768
    %v1770 = vsel %vm1769, %v1762, %v1766
    %v1771 = vand.u32 2147483647, %v816
    %vm1772 = vcmp.eq.f32.partialorder %v1771, 8.507059e+37
    %v1773 = vand.u32 %v816, 2147483648
    %v1774 = vor.u32 1.1754944e-38, %v1773
    %v1775 = vsel %vm1772, %v1774, %v1770
    %v1776 = vmul.f32 1.0, %v1775
    %v1777 = vmul.f32 %v402, %v831
    %v1778 = vmul.f32 %v404, %v846
    %v1779 = vmul.f32 %v407, %v861
    %v1780 = vmul.f32 %v409, %v876
    %v1781 = vmul.f32 %v412, %v891
    %v1782 = vmul.f32 %v414, %v906
    %v1783 = vmul.f32 %v417, %v921
    %v1784 = vmul.f32 %v419, %v936
    %v1785 = vmul.f32 %v422, %v951
    %v1786 = vmul.f32 %v424, %v966
    %v1787 = vmul.f32 %v427, %v981
    %v1788 = vmul.f32 %v429, %v996
    %v1789 = vmul.f32 %v432, %v1011
    %v1790 = vmul.f32 %v434, %v1026
    %v1791 = vmul.f32 %v437, %v1041
    %v1792 = vmul.f32 %v439, %v1056
    %v1793 = vmul.f32 %v442, %v1071
    %v1794 = vmul.f32 %v444, %v1086
    %v1795 = vmul.f32 %v447, %v1101
    %v1796 = vmul.f32 %v449, %v1116
    %v1797 = vmul.f32 %v452, %v1131
    %v1798 = vmul.f32 %v454, %v1146
    %v1799 = vmul.f32 %v457, %v1161
    %v1800 = vmul.f32 %v459, %v1176
    %v1801 = vmul.f32 %v462, %v1191
    %v1802 = vmul.f32 %v464, %v1206
    %v1803 = vmul.f32 %v467, %v1221
    %v1804 = vmul.f32 %v469, %v1236
    %v1805 = vmul.f32 %v472, %v1251
    %v1806 = vmul.f32 %v474, %v1266
    %v1807 = vmul.f32 %v477, %v1281
    %v1808 = vmul.f32 %v479, %v1296
    %v1809 = vmul.f32 %v482, %v1311
    %v1810 = vmul.f32 %v484, %v1326
    %v1811 = vmul.f32 %v487, %v1341
    %v1812 = vmul.f32 %v489, %v1356
    %v1813 = vmul.f32 %v492, %v1371
    %v1814 = vmul.f32 %v494, %v1386
    %v1815 = vmul.f32 %v497, %v1401
    %v1816 = vmul.f32 %v499, %v1416
    %v1817 = vmul.f32 %v502, %v1431
    %v1818 = vmul.f32 %v504, %v1446
    %v1819 = vmul.f32 %v507, %v1461
    %v1820 = vmul.f32 %v509, %v1476
    %v1821 = vmul.f32 %v512, %v1491
    %v1822 = vmul.f32 %v514, %v1506
    %v1823 = vmul.f32 %v517, %v1521
    %v1824 = vmul.f32 %v519, %v1536
    %v1825 = vmul.f32 %v522, %v1551
    %v1826 = vmul.f32 %v524, %v1566
    %v1827 = vmul.f32 %v527, %v1581
    %v1828 = vmul.f32 %v529, %v1596
    %v1829 = vmul.f32 %v532, %v1611
    %v1830 = vmul.f32 %v534, %v1626
    %v1831 = vmul.f32 %v537, %v1641
    %v1832 = vmul.f32 %v539, %v1656
    %v1833 = vmul.f32 %v542, %v1671
    %v1834 = vmul.f32 %v544, %v1686
    %v1835 = vmul.f32 %v547, %v1701
    %v1836 = vmul.f32 %v549, %v1716
    %v1837 = vmul.f32 %v552, %v1731
    %v1838 = vmul.f32 %v554, %v1746
    %v1839 = vmul.f32 %v557, %v1761
    %v1840 = vmul.f32 %v559, %v1776
    %v1841 = vpack.c.bf16 %v1778, %v1777
    %v1842 = vpack.c.bf16 %v1780, %v1779
    %v1843 = vpack.c.bf16 %v1782, %v1781
    %v1844 = vpack.c.bf16 %v1784, %v1783
    %v1845 = vpack.c.bf16 %v1786, %v1785
    %v1846 = vpack.c.bf16 %v1788, %v1787
    %v1847 = vpack.c.bf16 %v1790, %v1789
    %v1848 = vpack.c.bf16 %v1792, %v1791
    %v1849 = vpack.c.bf16 %v1794, %v1793
    %v1850 = vpack.c.bf16 %v1796, %v1795
    %v1851 = vpack.c.bf16 %v1798, %v1797
    %v1852 = vpack.c.bf16 %v1800, %v1799
    %v1853 = vpack.c.bf16 %v1802, %v1801
    %v1854 = vpack.c.bf16 %v1804, %v1803
    %v1855 = vpack.c.bf16 %v1806, %v1805
    %v1856 = vpack.c.bf16 %v1808, %v1807
    %v1857 = vpack.c.bf16 %v1810, %v1809
    %v1858 = vpack.c.bf16 %v1812, %v1811
    %v1859 = vpack.c.bf16 %v1814, %v1813
    %v1860 = vpack.c.bf16 %v1816, %v1815
    %v1861 = vpack.c.bf16 %v1818, %v1817
    %v1862 = vpack.c.bf16 %v1820, %v1819
    %v1863 = vpack.c.bf16 %v1822, %v1821
    %v1864 = vpack.c.bf16 %v1824, %v1823
    %v1865 = vpack.c.bf16 %v1826, %v1825
    %v1866 = vpack.c.bf16 %v1828, %v1827
    %v1867 = vpack.c.bf16 %v1830, %v1829
    %v1868 = vpack.c.bf16 %v1832, %v1831
    %v1869 = vpack.c.bf16 %v1834, %v1833
    %v1870 = vpack.c.bf16 %v1836, %v1835
    %v1871 = vpack.c.bf16 %v1838, %v1837
    %v1872 = vpack.c.bf16 %v1840, %v1839
    %v1873 = vld [vmem:[#allocation7] sm:$0xf]
    %v1874 = vld [vmem:[#allocation7 + $0x4] sm:$0xf]
    %v1875 = vld [vmem:[#allocation7 + $0x8] sm:$0xf]
    %v1876 = vld [vmem:[#allocation7 + $0xc] sm:$0xf]
    %v1877 = vld [vmem:[#allocation7 + $0x10] sm:$0xf]
    %v1878 = vld [vmem:[#allocation7 + $0x14] sm:$0xf]
    %v1879 = vld [vmem:[#allocation7 + $0x18] sm:$0xf]
    %v1880 = vld [vmem:[#allocation7 + $0x1c] sm:$0xf]
    %v1881 = vld [vmem:[#allocation7 + $0x20] sm:$0xf]
    %v1882 = vld [vmem:[#allocation7 + $0x24] sm:$0xf]
    %v1883 = vld [vmem:[#allocation7 + $0x28] sm:$0xf]
    %v1884 = vld [vmem:[#allocation7 + $0x2c] sm:$0xf]
    %v1885 = vld [vmem:[#allocation7 + $0x30] sm:$0xf]
    %v1886 = vld [vmem:[#allocation7 + $0x34] sm:$0xf]
    %v1887 = vld [vmem:[#allocation7 + $0x38] sm:$0xf]
    %v1888 = vld [vmem:[#allocation7 + $0x3c] sm:$0xf]
    %v1889 = vld [vmem:[%s4] sm:$0x1]
    %v1891 = vperm.slane %v1889, 0
    %v1909 = vunpack.c.l.b16 %v1873
    %v1910 = vunpack.c.l.b16 %v1874
    %v1911 = vunpack.c.l.b16 %v1875
    %v1912 = vunpack.c.l.b16 %v1876
    %v1913 = vunpack.c.l.b16 %v1877
    %v1914 = vunpack.c.l.b16 %v1878
    %v1915 = vunpack.c.l.b16 %v1879
    %v1916 = vunpack.c.l.b16 %v1880
    %v1917 = vunpack.c.l.b16 %v1881
    %v1918 = vunpack.c.l.b16 %v1882
    %v1919 = vunpack.c.l.b16 %v1883
    %v1920 = vunpack.c.l.b16 %v1884
    %v1921 = vunpack.c.l.b16 %v1885
    %v1922 = vunpack.c.l.b16 %v1886
    %v1923 = vunpack.c.l.b16 %v1887
    %v1924 = vunpack.c.l.b16 %v1888
    %v1925 = vpack.c.b16 %v1910, %v1909
    %v1926 = vpack.c.b16 %v1912, %v1911
    %v1927 = vpack.c.b16 %v1914, %v1913
    %v1928 = vpack.c.b16 %v1916, %v1915
    %v1929 = vpack.c.b16 %v1918, %v1917
    %v1930 = vpack.c.b16 %v1920, %v1919
    %v1931 = vpack.c.b16 %v1922, %v1921
    %v1932 = vpack.c.b16 %v1924, %v1923
    %1941 = vmatpush.bf16.msra.mxu0 %v1932
    %1942 = vmatpush.bf16.msra.mxu0 %v1931
    %1943 = vmatpush.bf16.msra.mxu0 %v1930
    %1944 = vmatpush.bf16.msra.mxu0 %v1929
    %1945 = vmatpush.bf16.msra.mxu0 %v1928
    %1946 = vmatpush.bf16.msra.mxu0 %v1927
    %1947 = vmatpush.bf16.msra.mxu0 %v1926
    %1948 = vmatpush.bf16.msra.mxu0 %v1925
    %1949 = vmatmul.bf16.gmra.mxu0 %v1841
    %v1950 = vpop.f32.mrf.mxu0
    %v1951 = vadd.f32 %v1891, %v1950
    %v1952 = vpop.f32.mrf.mxu0
    %v1953 = vadd.f32 %v1891, %v1952
    %1954 = vmatmul.bf16.gmra.mxu0 %v1842
    %v1955 = vpop.f32.mrf.mxu0
    %v1956 = vadd.f32 %v1891, %v1955
    %v1957 = vpop.f32.mrf.mxu0
    %v1958 = vadd.f32 %v1891, %v1957
    %1959 = vmatmul.bf16.gmra.mxu0 %v1843
    %v1960 = vpop.f32.mrf.mxu0
    %v1961 = vadd.f32 %v1891, %v1960
    %v1962 = vpop.f32.mrf.mxu0
    %v1963 = vadd.f32 %v1891, %v1962
    %1964 = vmatmul.bf16.gmra.mxu0 %v1844
    %v1965 = vpop.f32.mrf.mxu0
    %v1966 = vadd.f32 %v1891, %v1965
    %v1967 = vpop.f32.mrf.mxu0
    %v1968 = vadd.f32 %v1891, %v1967
    %1969 = vmatmul.bf16.gmra.mxu0 %v1845
    %v1970 = vpop.f32.mrf.mxu0
    %v1971 = vadd.f32 %v1891, %v1970
    %v1972 = vpop.f32.mrf.mxu0
    %v1973 = vadd.f32 %v1891, %v1972
    %1974 = vmatmul.bf16.gmra.mxu0 %v1846
    %v1975 = vpop.f32.mrf.mxu0
    %v1976 = vadd.f32 %v1891, %v1975
    %v1977 = vpop.f32.mrf.mxu0
    %v1978 = vadd.f32 %v1891, %v1977
    %1979 = vmatmul.bf16.gmra.mxu0 %v1847
    %v1980 = vpop.f32.mrf.mxu0
    %v1981 = vadd.f32 %v1891, %v1980
    %v1982 = vpop.f32.mrf.mxu0
    %v1983 = vadd.f32 %v1891, %v1982
    %1984 = vmatmul.bf16.gmra.mxu0 %v1848
    %v1985 = vpop.f32.mrf.mxu0
    %v1986 = vadd.f32 %v1891, %v1985
    %v1987 = vpop.f32.mrf.mxu0
    %v1988 = vadd.f32 %v1891, %v1987
    %1989 = vmatmul.bf16.gmra.mxu0 %v1849
    %v1990 = vpop.f32.mrf.mxu0
    %v1991 = vadd.f32 %v1891, %v1990
    %v1992 = vpop.f32.mrf.mxu0
    %v1993 = vadd.f32 %v1891, %v1992
    %1994 = vmatmul.bf16.gmra.mxu0 %v1850
    %v1995 = vpop.f32.mrf.mxu0
    %v1996 = vadd.f32 %v1891, %v1995
    %v1997 = vpop.f32.mrf.mxu0
    %v1998 = vadd.f32 %v1891, %v1997
    %1999 = vmatmul.bf16.gmra.mxu0 %v1851
    %v2000 = vpop.f32.mrf.mxu0
    %v2001 = vadd.f32 %v1891, %v2000
    %v2002 = vpop.f32.mrf.mxu0
    %v2003 = vadd.f32 %v1891, %v2002
    %2004 = vmatmul.bf16.gmra.mxu0 %v1852
    %v2005 = vpop.f32.mrf.mxu0
    %v2006 = vadd.f32 %v1891, %v2005
    %v2007 = vpop.f32.mrf.mxu0
    %v2008 = vadd.f32 %v1891, %v2007
    %2009 = vmatmul.bf16.gmra.mxu0 %v1853
    %v2010 = vpop.f32.mrf.mxu0
    %v2011 = vadd.f32 %v1891, %v2010
    %v2012 = vpop.f32.mrf.mxu0
    %v2013 = vadd.f32 %v1891, %v2012
    %2014 = vmatmul.bf16.gmra.mxu0 %v1854
    %v2015 = vpop.f32.mrf.mxu0
    %v2016 = vadd.f32 %v1891, %v2015
    %v2017 = vpop.f32.mrf.mxu0
    %v2018 = vadd.f32 %v1891, %v2017
    %2019 = vmatmul.bf16.gmra.mxu0 %v1855
    %v2020 = vpop.f32.mrf.mxu0
    %v2021 = vadd.f32 %v1891, %v2020
    %v2022 = vpop.f32.mrf.mxu0
    %v2023 = vadd.f32 %v1891, %v2022
    %2024 = vmatmul.bf16.gmra.mxu0 %v1856
    %v2025 = vpop.f32.mrf.mxu0
    %v2026 = vadd.f32 %v1891, %v2025
    %v2027 = vpop.f32.mrf.mxu0
    %v2028 = vadd.f32 %v1891, %v2027
    %2029 = vmatmul.bf16.gmra.mxu0 %v1857
    %v2030 = vpop.f32.mrf.mxu0
    %v2031 = vadd.f32 %v1891, %v2030
    %v2032 = vpop.f32.mrf.mxu0
    %v2033 = vadd.f32 %v1891, %v2032
    %2034 = vmatmul.bf16.gmra.mxu0 %v1858
    %v2035 = vpop.f32.mrf.mxu0
    %v2036 = vadd.f32 %v1891, %v2035
    %v2037 = vpop.f32.mrf.mxu0
    %v2038 = vadd.f32 %v1891, %v2037
    %2039 = vmatmul.bf16.gmra.mxu0 %v1859
    %v2040 = vpop.f32.mrf.mxu0
    %v2041 = vadd.f32 %v1891, %v2040
    %v2042 = vpop.f32.mrf.mxu0
    %v2043 = vadd.f32 %v1891, %v2042
    %2044 = vmatmul.bf16.gmra.mxu0 %v1860
    %v2045 = vpop.f32.mrf.mxu0
    %v2046 = vadd.f32 %v1891, %v2045
    %v2047 = vpop.f32.mrf.mxu0
    %v2048 = vadd.f32 %v1891, %v2047
    %2049 = vmatmul.bf16.gmra.mxu0 %v1861
    %v2050 = vpop.f32.mrf.mxu0
    %v2051 = vadd.f32 %v1891, %v2050
    %v2052 = vpop.f32.mrf.mxu0
    %v2053 = vadd.f32 %v1891, %v2052
    %2054 = vmatmul.bf16.gmra.mxu0 %v1862
    %v2055 = vpop.f32.mrf.mxu0
    %v2056 = vadd.f32 %v1891, %v2055
    %v2057 = vpop.f32.mrf.mxu0
    %v2058 = vadd.f32 %v1891, %v2057
    %2059 = vmatmul.bf16.gmra.mxu0 %v1863
    %v2060 = vpop.f32.mrf.mxu0
    %v2061 = vadd.f32 %v1891, %v2060
    %v2062 = vpop.f32.mrf.mxu0
    %v2063 = vadd.f32 %v1891, %v2062
    %2064 = vmatmul.bf16.gmra.mxu0 %v1864
    %v2065 = vpop.f32.mrf.mxu0
    %v2066 = vadd.f32 %v1891, %v2065
    %v2067 = vpop.f32.mrf.mxu0
    %v2068 = vadd.f32 %v1891, %v2067
    %2069 = vmatmul.bf16.gmra.mxu0 %v1865
    %v2070 = vpop.f32.mrf.mxu0
    %v2071 = vadd.f32 %v1891, %v2070
    %v2072 = vpop.f32.mrf.mxu0
    %v2073 = vadd.f32 %v1891, %v2072
    %2074 = vmatmul.bf16.gmra.mxu0 %v1866
    %v2075 = vpop.f32.mrf.mxu0
    %v2076 = vadd.f32 %v1891, %v2075
    %v2077 = vpop.f32.mrf.mxu0
    %v2078 = vadd.f32 %v1891, %v2077
    %2079 = vmatmul.bf16.gmra.mxu0 %v1867
    %v2080 = vpop.f32.mrf.mxu0
    %v2081 = vadd.f32 %v1891, %v2080
    %v2082 = vpop.f32.mrf.mxu0
    %v2083 = vadd.f32 %v1891, %v2082
    %2084 = vmatmul.bf16.gmra.mxu0 %v1868
    %v2085 = vpop.f32.mrf.mxu0
    %v2086 = vadd.f32 %v1891, %v2085
    %v2087 = vpop.f32.mrf.mxu0
    %v2088 = vadd.f32 %v1891, %v2087
    %2089 = vmatmul.bf16.gmra.mxu0 %v1869
    %v2090 = vpop.f32.mrf.mxu0
    %v2091 = vadd.f32 %v1891, %v2090
    %v2092 = vpop.f32.mrf.mxu0
    %v2093 = vadd.f32 %v1891, %v2092
    %2094 = vmatmul.bf16.gmra.mxu0 %v1870
    %v2095 = vpop.f32.mrf.mxu0
    %v2096 = vadd.f32 %v1891, %v2095
    %v2097 = vpop.f32.mrf.mxu0
    %v2098 = vadd.f32 %v1891, %v2097
    %2099 = vmatmul.bf16.gmra.mxu0 %v1871
    %v2100 = vpop.f32.mrf.mxu0
    %v2101 = vadd.f32 %v1891, %v2100
    %v2102 = vpop.f32.mrf.mxu0
    %v2103 = vadd.f32 %v1891, %v2102
    %2104 = vmatmul.bf16.gmra.mxu0 %v1872
    %v2105 = vpop.f32.mrf.mxu0
    %v2106 = vadd.f32 %v1891, %v2105
    %v2107 = vpop.f32.mrf.mxu0
    %v2108 = vadd.f32 %v1891, %v2107
    %2109 = vdwg.mxu0
    %v2110 = vpack.c.bf16 %v1951, %v1951
    %v2111 = vpack.c.bf16 %v1953, %v1953
    %v2112 = vpack.c.bf16 %v1956, %v1956
    %v2113 = vpack.c.bf16 %v1958, %v1958
    %v2114 = vpack.c.bf16 %v1961, %v1961
    %v2115 = vpack.c.bf16 %v1963, %v1963
    %v2116 = vpack.c.bf16 %v1966, %v1966
    %v2117 = vpack.c.bf16 %v1968, %v1968
    %v2118 = vpack.c.bf16 %v1971, %v1971
    %v2119 = vpack.c.bf16 %v1973, %v1973
    %v2120 = vpack.c.bf16 %v1976, %v1976
    %v2121 = vpack.c.bf16 %v1978, %v1978
    %v2122 = vpack.c.bf16 %v1981, %v1981
    %v2123 = vpack.c.bf16 %v1983, %v1983
    %v2124 = vpack.c.bf16 %v1986, %v1986
    %v2125 = vpack.c.bf16 %v1988, %v1988
    %v2126 = vpack.c.bf16 %v1991, %v1991
    %v2127 = vpack.c.bf16 %v1993, %v1993
    %v2128 = vpack.c.bf16 %v1996, %v1996
    %v2129 = vpack.c.bf16 %v1998, %v1998
    %v2130 = vpack.c.bf16 %v2001, %v2001
    %v2131 = vpack.c.bf16 %v2003, %v2003
    %v2132 = vpack.c.bf16 %v2006, %v2006
    %v2133 = vpack.c.bf16 %v2008, %v2008
    %v2134 = vpack.c.bf16 %v2011, %v2011
    %v2135 = vpack.c.bf16 %v2013, %v2013
    %v2136 = vpack.c.bf16 %v2016, %v2016
    %v2137 = vpack.c.bf16 %v2018, %v2018
    %v2138 = vpack.c.bf16 %v2021, %v2021
    %v2139 = vpack.c.bf16 %v2023, %v2023
    %v2140 = vpack.c.bf16 %v2026, %v2026
    %v2141 = vpack.c.bf16 %v2028, %v2028
    %v2142 = vpack.c.bf16 %v2031, %v2031
    %v2143 = vpack.c.bf16 %v2033, %v2033
    %v2144 = vpack.c.bf16 %v2036, %v2036
    %v2145 = vpack.c.bf16 %v2038, %v2038
    %v2146 = vpack.c.bf16 %v2041, %v2041
    %v2147 = vpack.c.bf16 %v2043, %v2043
    %v2148 = vpack.c.bf16 %v2046, %v2046
    %v2149 = vpack.c.bf16 %v2048, %v2048
    %v2150 = vpack.c.bf16 %v2051, %v2051
    %v2151 = vpack.c.bf16 %v2053, %v2053
    %v2152 = vpack.c.bf16 %v2056, %v2056
    %v2153 = vpack.c.bf16 %v2058, %v2058
    %v2154 = vpack.c.bf16 %v2061, %v2061
    %v2155 = vpack.c.bf16 %v2063, %v2063
    %v2156 = vpack.c.bf16 %v2066, %v2066
    %v2157 = vpack.c.bf16 %v2068, %v2068
    %v2158 = vpack.c.bf16 %v2071, %v2071
    %v2159 = vpack.c.bf16 %v2073, %v2073
    %v2160 = vpack.c.bf16 %v2076, %v2076
    %v2161 = vpack.c.bf16 %v2078, %v2078
    %v2162 = vpack.c.bf16 %v2081, %v2081
    %v2163 = vpack.c.bf16 %v2083, %v2083
    %v2164 = vpack.c.bf16 %v2086, %v2086
    %v2165 = vpack.c.bf16 %v2088, %v2088
    %v2166 = vpack.c.bf16 %v2091, %v2091
    %v2167 = vpack.c.bf16 %v2093, %v2093
    %v2168 = vpack.c.bf16 %v2096, %v2096
    %v2169 = vpack.c.bf16 %v2098, %v2098
    %v2170 = vpack.c.bf16 %v2101, %v2101
    %v2171 = vpack.c.bf16 %v2103, %v2103
    %v2172 = vpack.c.bf16 %v2106, %v2106
    %v2173 = vpack.c.bf16 %v2108, %v2108
    %2174 = vst [vmem:[#allocation8] sm:$0xf] %v2110
    %2175 = vst [vmem:[#allocation8 + $0x4] sm:$0xf] %v2111
    %2176 = vst [vmem:[#allocation8 + $0x8] sm:$0xf] %v2112
    %2177 = vst [vmem:[#allocation8 + $0xc] sm:$0xf] %v2113
    %2178 = vst [vmem:[#allocation8 + $0x10] sm:$0xf] %v2114
    %2179 = vst [vmem:[#allocation8 + $0x14] sm:$0xf] %v2115
    %2180 = vst [vmem:[#allocation8 + $0x18] sm:$0xf] %v2116
    %2181 = vst [vmem:[#allocation8 + $0x1c] sm:$0xf] %v2117
    %2182 = vst [vmem:[#allocation8 + $0x20] sm:$0xf] %v2118
    %2183 = vst [vmem:[#allocation8 + $0x24] sm:$0xf] %v2119
    %2184 = vst [vmem:[#allocation8 + $0x28] sm:$0xf] %v2120
    %2185 = vst [vmem:[#allocation8 + $0x2c] sm:$0xf] %v2121
    %2186 = vst [vmem:[#allocation8 + $0x30] sm:$0xf] %v2122
    %2187 = vst [vmem:[#allocation8 + $0x34] sm:$0xf] %v2123
    %2188 = vst [vmem:[#allocation8 + $0x38] sm:$0xf] %v2124
    %2189 = vst [vmem:[#allocation8 + $0x3c] sm:$0xf] %v2125
    %2190 = vst [vmem:[#allocation8 + $0x40] sm:$0xf] %v2126
    %2191 = vst [vmem:[#allocation8 + $0x44] sm:$0xf] %v2127
    %2192 = vst [vmem:[#allocation8 + $0x48] sm:$0xf] %v2128
    %2193 = vst [vmem:[#allocation8 + $0x4c] sm:$0xf] %v2129
    %2194 = vst [vmem:[#allocation8 + $0x50] sm:$0xf] %v2130
    %2195 = vst [vmem:[#allocation8 + $0x54] sm:$0xf] %v2131
    %2196 = vst [vmem:[#allocation8 + $0x58] sm:$0xf] %v2132
    %2197 = vst [vmem:[#allocation8 + $0x5c] sm:$0xf] %v2133
    %2198 = vst [vmem:[#allocation8 + $0x60] sm:$0xf] %v2134
    %2199 = vst [vmem:[#allocation8 + $0x64] sm:$0xf] %v2135
    %2200 = vst [vmem:[#allocation8 + $0x68] sm:$0xf] %v2136
    %2201 = vst [vmem:[#allocation8 + $0x6c] sm:$0xf] %v2137
    %2202 = vst [vmem:[#allocation8 + $0x70] sm:$0xf] %v2138
    %2203 = vst [vmem:[#allocation8 + $0x74] sm:$0xf] %v2139
    %2204 = vst [vmem:[#allocation8 + $0x78] sm:$0xf] %v2140
    %2205 = vst [vmem:[#allocation8 + $0x7c] sm:$0xf] %v2141
    %2206 = vst [vmem:[#allocation8 + $0x80] sm:$0xf] %v2142
    %2207 = vst [vmem:[#allocation8 + $0x84] sm:$0xf] %v2143
    %2208 = vst [vmem:[#allocation8 + $0x88] sm:$0xf] %v2144
    %2209 = vst [vmem:[#allocation8 + $0x8c] sm:$0xf] %v2145
    %2210 = vst [vmem:[#allocation8 + $0x90] sm:$0xf] %v2146
    %2211 = vst [vmem:[#allocation8 + $0x94] sm:$0xf] %v2147
    %2212 = vst [vmem:[#allocation8 + $0x98] sm:$0xf] %v2148
    %2213 = vst [vmem:[#allocation8 + $0x9c] sm:$0xf] %v2149
    %2214 = vst [vmem:[#allocation8 + $0xa0] sm:$0xf] %v2150
    %2215 = vst [vmem:[#allocation8 + $0xa4] sm:$0xf] %v2151
    %2216 = vst [vmem:[#allocation8 + $0xa8] sm:$0xf] %v2152
    %2217 = vst [vmem:[#allocation8 + $0xac] sm:$0xf] %v2153
    %2218 = vst [vmem:[#allocation8 + $0xb0] sm:$0xf] %v2154
    %2219 = vst [vmem:[#allocation8 + $0xb4] sm:$0xf] %v2155
    %2220 = vst [vmem:[#allocation8 + $0xb8] sm:$0xf] %v2156
    %2221 = vst [vmem:[#allocation8 + $0xbc] sm:$0xf] %v2157
    %2222 = vst [vmem:[#allocation8 + $0xc0] sm:$0xf] %v2158
    %2223 = vst [vmem:[#allocation8 + $0xc4] sm:$0xf] %v2159
    %2224 = vst [vmem:[#allocation8 + $0xc8] sm:$0xf] %v2160
    %2225 = vst [vmem:[#allocation8 + $0xcc] sm:$0xf] %v2161
    %2226 = vst [vmem:[#allocation8 + $0xd0] sm:$0xf] %v2162
    %2227 = vst [vmem:[#allocation8 + $0xd4] sm:$0xf] %v2163
    %2228 = vst [vmem:[#allocation8 + $0xd8] sm:$0xf] %v2164
    %2229 = vst [vmem:[#allocation8 + $0xdc] sm:$0xf] %v2165
    %2230 = vst [vmem:[#allocation8 + $0xe0] sm:$0xf] %v2166
    %2231 = vst [vmem:[#allocation8 + $0xe4] sm:$0xf] %v2167
    %2232 = vst [vmem:[#allocation8 + $0xe8] sm:$0xf] %v2168
    %2233 = vst [vmem:[#allocation8 + $0xec] sm:$0xf] %v2169
    %2234 = vst [vmem:[#allocation8 + $0xf0] sm:$0xf] %v2170
    %2235 = vst [vmem:[#allocation8 + $0xf4] sm:$0xf] %v2171
    %2236 = vst [vmem:[#allocation8 + $0xf8] sm:$0xf] %v2172
    %2237 = vst [vmem:[#allocation8 + $0xfc] sm:$0xf] %v2173
    // Predicated region
    $region34: #{tpu_custom_call.1} parent=1 // pred_check
      _
    $region35: #{tpu_custom_call.1} parent=1 // pred_check_branch
      %2239 = sbr.rel (0) target = $region37
    $region36: #{tpu_custom_call.1} parent=1 // pred_region
      %2241 = vsyncadd [#allocation4], 0
      %s2242 = sshll.u32 [#allocation8], 4
      %s2243 = int_to_ptr.vmem [resolvable:$true] %s2242
      %s2244 = sshll.u32 %s5, 4
      %s2245 = int_to_ptr.hbm [resolvable:$true] %s2244
      %2250 = dma.vmem_to_hbm [thread:$0]  %s2243, 4096, %s2245, [#allocation4], 64, 64, 4
    $region37: #{tpu_custom_call.1} parent=1 // pred_fallthru
      _
    // Predicated region
    $region38: #{tpu_custom_call.1} parent=1 // pred_check
      _
    $region39: #{tpu_custom_call.1} parent=1 // pred_check_branch
      %2252 = sbr.rel (0) target = $region41
    $region40: #{tpu_custom_call.1} parent=1 // pred_region
      %2254 = dma.done [#allocation4], 4096
    $region41: #{tpu_custom_call.1} parent=1 // pred_fallthru
      _
    %2255 = vsyncpa [#allocation3], 1
    %2256 = vsyncpa [#allocation6], 1
    %2257 = vsyncpa [#allocation4], 1

</llo_original>
